<compile_context>
chip_gen: v7x
topology: tpu7x:2x2x1
jax: 0.10.0
libtpu: 0.0.40
codegen_flags: <defaults>
</compile_context>

<pallas_src>
import functools

import jax
import jax.numpy as jnp
from jax import lax
from jax.experimental import pallas as pl
from jax.experimental.pallas import tpu as pltpu


def _mis_ins_resblock_kernel(x_ref, w1_ref, w2_ref, w1ax_ref, w1b_ref,
                             w2ax_ref, w2b_ref, bias_ref, o_ref,
                             *, H, W, C, eps):
    # x_ref:    (1, C, H*W)   one batch element, channel-major, lane-dense
    # w?_ref:   (C, 9*C)      3x3 conv weight in im2col layout, tap-major
    # w?ax_ref: (Ce, C)       (first 1x1 conv of blk?)^T, feature rows only
    # w?b_ref:  (C, Ce)       (second 1x1 conv of blk?)^T
    # bias_ref: (1, Ce, 4)    columns: [zb1 | zb2 | b1b(pad) | b2b(pad)]
    HW = H * W
    x = x_ref[0]                                           # (C, HW) f32

    # Per-lane width coordinate, reused by both convs for the reflection fixes.
    wcoord = lax.broadcasted_iota(jnp.int32, (C, HW), 1) % W
    w_first = wcoord == 0
    w_last = wcoord == (W - 1)

    def lsh(v):
        # out[:, f] = v[:, f + 1]; the wrapped last lane is always overridden
        # by the reflection select below.
        return jnp.concatenate([v[:, 1:], v[:, :1]], axis=1)

    def rsh(v):
        # out[:, f] = v[:, f - 1]; wrapped first lane overridden below.
        return jnp.concatenate([v[:, -1:], v[:, :-1]], axis=1)

    def conv3x3_instnorm(a, w_ref):
        # a: (C, HW).  Reflection-padded 3x3 conv as one K=9C matmul, then
        # InstanceNorm2d(affine=False).  Conv bias omitted (cancels in the IN).
        # Vertical (row) reflected shifts, exact via flat-lane slicing:
        up = jnp.concatenate([a[:, W:2 * W], a[:, :HW - W]], axis=1)       # dh = -1
        dn = jnp.concatenate([a[:, W:], a[:, HW - 2 * W:HW - W]], axis=1)  # dh = +1
        taps = []
        for v in (up, a, dn):                       # dh = -1, 0, +1
            l, r = lsh(v), rsh(v)
            taps.append(jnp.where(w_first, l, r))   # dw = -1 (reflect at w=0)
            taps.append(v)                          # dw =  0
            taps.append(jnp.where(w_last, r, l))    # dw = +1 (reflect at w=W-1)
        patch = jnp.concatenate(taps, axis=0)       # (9C, HW)
        y = jnp.dot(w_ref[...], patch,
                    preferred_element_type=jnp.float32)                    # (C, HW)
        # Fused IN statistics: var = E[y^2] - mu^2 (biased var, PyTorch IN).
        s1 = jnp.sum(y, axis=-1, keepdims=True)
        s2 = jnp.sum(y * y, axis=-1, keepdims=True)
        mu = s1 * (1.0 / HW)
        var = s2 * (1.0 / HW) - mu * mu
        return (y - mu) * lax.rsqrt(var + eps)

    bias = bias_ref[0]                              # (Ce, 4)
    zb1 = bias[:, 0:1]                              # (Ce, 1)
    zb2 = bias[:, 1:2]
    b1b = bias[:C, 2:3]                             # (C, 1)
    b2b = bias[:C, 3:4]

    # conv1 + blk1
    o1 = conv3x3_instnorm(x, w1_ref)
    t1 = jnp.maximum(
        jnp.dot(w1ax_ref[...], o1, preferred_element_type=jnp.float32) + zb1, 0.0)
    o2 = jnp.maximum(
        jnp.dot(w1b_ref[...], t1, preferred_element_type=jnp.float32) + b1b, 0.0)

    # conv2 + blk2
    o3 = conv3x3_instnorm(o2, w2_ref)
    t2 = jnp.maximum(
        jnp.dot(w2ax_ref[...], o3, preferred_element_type=jnp.float32) + zb2, 0.0)
    o4 = jnp.maximum(
        jnp.dot(w2b_ref[...], t2, preferred_element_type=jnp.float32) + b2b, 0.0)

    # residual
    o_ref[0] = (o4 + x).astype(o_ref.dtype)


def mis_ins_resblock_pallas(x_nchw, z, w1, b1, w2, b2,
                            w1a, b1a, w1b, b1b, w2a, b2a, w2b, b2b):
    """MisINSResBlock.forward(x, z).

    x_nchw: (N, C, H, W) f32.  z: (N, Cz) f32.
    w1/w2:  (3, 3, C, C)  HWIO conv weights (= torch weight.permute(2,3,1,0)).
    w1a/w2a: (C+Cz, C+Cz), w1b/w2b: (C+Cz, C)  1x1 conv weights, (in, out) layout.
    Biases are 1-D (out_channels,).
    """
    N, C, H, W = x_nchw.shape
    Cz = z.shape[1]
    Ce = C + Cz
    assert H >= 2 and W >= 2, "ReflectionPad2d(1) requires H >= 2 and W >= 2"

    # conv biases b1/b2 are mathematically canceled by the affine-less
    # InstanceNorm2d that follows them, so they never enter the kernel.
    del b1, b2

    f32 = jnp.float32
    # Channel-major, lane-dense layout; this reshape of contiguous NCHW is free.
    x_flat = x_nchw.reshape(N, C, H * W).astype(f32)

    # 3x3 conv weights HWIO -> im2col layout (C_out, 9*C_in), tap-major so the
    # column index is (dh+1)*3*C + (dw+1)*C + c_in, matching the kernel's
    # patch-row order.
    w1_t = jnp.transpose(w1.astype(f32), (3, 0, 1, 2)).reshape(C, 9 * C)
    w2_t = jnp.transpose(w2.astype(f32), (3, 0, 1, 2)).reshape(C, 9 * C)

    # 1x1 convs transposed for the (C, H*W) layout; the z part of the first
    # conv of each blk folds into a tiny per-sample bias column.
    w1ax_t = jnp.transpose(w1a[:C]).astype(f32)            # (Ce, C)
    w2ax_t = jnp.transpose(w2a[:C]).astype(f32)
    w1b_t = jnp.transpose(w1b).astype(f32)                 # (C, Ce)
    w2b_t = jnp.transpose(w2b).astype(f32)

    zb1 = (z @ w1a[C:] + b1a).astype(f32)                  # (N, Ce)
    zb2 = (z @ w2a[C:] + b2a).astype(f32)
    zpad = jnp.zeros((Cz,), f32)
    b1b_pad = jnp.broadcast_to(jnp.concatenate([b1b.astype(f32), zpad]), (N, Ce))
    b2b_pad = jnp.broadcast_to(jnp.concatenate([b2b.astype(f32), zpad]), (N, Ce))
    bias_pack = jnp.stack([zb1, zb2, b1b_pad, b2b_pad], axis=-1)   # (N, Ce, 4)

    kernel = functools.partial(_mis_ins_resblock_kernel,
                               H=H, W=W, C=C, eps=1e-5)

    out_flat = pl.pallas_call(
        kernel,
        out_shape=jax.ShapeDtypeStruct((N, C, H * W), f32),
        grid_spec=pltpu.PrefetchScalarGridSpec(
            num_scalar_prefetch=0,
            grid=(N,),
            in_specs=[
                pl.BlockSpec((1, C, H * W), lambda n: (n, 0, 0)),   # x
                pl.BlockSpec((C, 9 * C), lambda n: (0, 0)),         # w1 (im2col)
                pl.BlockSpec((C, 9 * C), lambda n: (0, 0)),         # w2 (im2col)
                pl.BlockSpec((Ce, C), lambda n: (0, 0)),            # w1a^T (x part)
                pl.BlockSpec((C, Ce), lambda n: (0, 0)),            # w1b^T
                pl.BlockSpec((Ce, C), lambda n: (0, 0)),            # w2a^T (x part)
                pl.BlockSpec((C, Ce), lambda n: (0, 0)),            # w2b^T
                pl.BlockSpec((1, Ce, 4), lambda n: (n, 0, 0)),      # packed biases
            ],
            out_specs=pl.BlockSpec((1, C, H * W), lambda n: (n, 0, 0)),
        ),
        compiler_params=pltpu.CompilerParams(
            dimension_semantics=("parallel",)),
    )(x_flat, w1_t, w2_t, w1ax_t, w1b_t, w2ax_t, w2b_t, bias_pack)

    return out_flat.reshape(N, C, H, W)                   # free reshape, still NCHW


def mis_ins_resblock_reference(x_nchw, z, w1, b1, w2, b2,
                               w1a, b1a, w1b, b1b, w2a, b2a, w2b, b2b):
    """Pure-JAX reference with PyTorch MisINSResBlock semantics."""
    x = jnp.transpose(x_nchw, (0, 2, 3, 1))
    N, H, W, C = x.shape
    Cz = z.shape[1]
    dn = ('NHWC', 'HWIO', 'NHWC')
    eps = 1e-5

    def conv_in(a, w, b):      # ReflectionPad2d(1) -> Conv2d(3x3) -> InstanceNorm2d
        p = jnp.pad(a, ((0, 0), (1, 1), (1, 1), (0, 0)), mode='reflect')
        y = lax.conv_general_dilated(p, w, (1, 1), 'VALID',
                                     dimension_numbers=dn) + b
        mu = jnp.mean(y, axis=(1, 2), keepdims=True)
        var = jnp.mean((y - mu) ** 2, axis=(1, 2), keepdims=True)
        return (y - mu) * lax.rsqrt(var + eps)

    zmap = jnp.broadcast_to(z[:, None, None, :], (N, H, W, Cz))

    def blk(a, wa, ba, wb, bb):   # conv1x1 -> ReLU -> conv1x1 -> ReLU
        c = jnp.concatenate([a, zmap], axis=-1)
        t = jax.nn.relu(jnp.einsum('nhwi,io->nhwo', c, wa) + ba)
        return jax.nn.relu(jnp.einsum('nhwi,io->nhwo', t, wb) + bb)

    o1 = conv_in(x, w1, b1)
    o2 = blk(o1, w1a, b1a, w1b, b1b)
    o3 = conv_in(o2, w2, b2)
    o4 = blk(o3, w2a, b2a, w2b, b2b)
    out = o4 + x
    return jnp.transpose(out, (0, 3, 1, 2))


if __name__ == "__main__":
    # MisINSResBlock(dim=32, dim_extra=8) at a small spatial size.
    N, C, H, W = 2, 32, 16, 16
    Cz = 8
    Ce = C + Cz

    key = jax.random.PRNGKey(0)
    ks = jax.random.split(key, 14)

    x = jax.random.normal(ks[0], (N, C, H, W), dtype=jnp.float32)
    z = jax.random.normal(ks[1], (N, Cz), dtype=jnp.float32)

    # Synthetic parameters (conv weights HWIO, 1x1 weights (in, out)).
    w1 = 0.1 * jax.random.normal(ks[2], (3, 3, C, C), dtype=jnp.float32)
    b1 = 0.1 * jax.random.normal(ks[3], (C,), dtype=jnp.float32)
    w2 = 0.1 * jax.random.normal(ks[4], (3, 3, C, C), dtype=jnp.float32)
    b2 = 0.1 * jax.random.normal(ks[5], (C,), dtype=jnp.float32)
    w1a = 0.1 * jax.random.normal(ks[6], (Ce, Ce), dtype=jnp.float32)
    b1a = 0.1 * jax.random.normal(ks[7], (Ce,), dtype=jnp.float32)
    w1b = 0.1 * jax.random.normal(ks[8], (Ce, C), dtype=jnp.float32)
    b1b = 0.1 * jax.random.normal(ks[9], (C,), dtype=jnp.float32)
    w2a = 0.1 * jax.random.normal(ks[10], (Ce, Ce), dtype=jnp.float32)
    b2a = 0.1 * jax.random.normal(ks[11], (Ce,), dtype=jnp.float32)
    w2b = 0.1 * jax.random.normal(ks[12], (Ce, C), dtype=jnp.float32)
    b2b = 0.1 * jax.random.normal(ks[13], (C,), dtype=jnp.float32)

    args = (x, z, w1, b1, w2, b2, w1a, b1a, w1b, b1b, w2a, b2a, w2b, b2b)

    out = mis_ins_resblock_pallas(*args)
    out = jax.block_until_ready(out)

    ref = mis_ins_resblock_reference(*args)
    assert out.shape == (N, C, H, W)
    max_err = float(jnp.max(jnp.abs(out - ref)))
    assert jnp.allclose(out, ref, rtol=1e-3, atol=1e-3), max_err

    print("KERNEL_OK")
</pallas_src>

<mosaic_0001>
module attributes {stable_mosaic.version = 11 : i64} {
  func.func @_mis_ins_resblock_kernel(%arg0: i32, %arg1: memref<1x32x256xf32, #tpu.memory_space<vmem>>, %arg2: memref<32x288xf32, #tpu.memory_space<vmem>>, %arg3: memref<32x288xf32, #tpu.memory_space<vmem>>, %arg4: memref<40x32xf32, #tpu.memory_space<vmem>>, %arg5: memref<32x40xf32, #tpu.memory_space<vmem>>, %arg6: memref<40x32xf32, #tpu.memory_space<vmem>>, %arg7: memref<32x40xf32, #tpu.memory_space<vmem>>, %arg8: memref<1x40x4xf32, #tpu.memory_space<vmem>>, %arg9: memref<1x32x256xf32, #tpu.memory_space<vmem>>) attributes {dimension_semantics = [#tpu.dimension_semantics<parallel>], iteration_bounds = array<i64: 2>, scalar_prefetch = 0 : i64, scratch_operands = 0 : i64, tpu.core_type = #tpu.core_type<tc>, window_params = [{transform_indices = @transform_0, window_bounds = array<i64: 1, 32, 256>}, {pipeline_mode = #tpu.pipeline_mode<synchronous>, transform_indices = @transform_1, window_bounds = array<i64: 32, 288>}, {pipeline_mode = #tpu.pipeline_mode<synchronous>, transform_indices = @transform_2, window_bounds = array<i64: 32, 288>}, {pipeline_mode = #tpu.pipeline_mode<synchronous>, transform_indices = @transform_3, window_bounds = array<i64: 40, 32>}, {pipeline_mode = #tpu.pipeline_mode<synchronous>, transform_indices = @transform_4, window_bounds = array<i64: 32, 40>}, {pipeline_mode = #tpu.pipeline_mode<synchronous>, transform_indices = @transform_5, window_bounds = array<i64: 40, 32>}, {pipeline_mode = #tpu.pipeline_mode<synchronous>, transform_indices = @transform_6, window_bounds = array<i64: 32, 40>}, {transform_indices = @transform_7, window_bounds = array<i64: 1, 40, 4>}, {transform_indices = @transform_8, window_bounds = array<i64: 1, 32, 256>}]} {
    %c0 = arith.constant 0 : index
    %c0_0 = arith.constant 0 : index
    %c0_1 = arith.constant 0 : index
    %0 = vector.load %arg1[%c0, %c0_0, %c0_1] : memref<1x32x256xf32, #tpu.memory_space<vmem>>, vector<1x32x256xf32>
    %1 = vector.shape_cast %0 : vector<1x32x256xf32> to vector<32x256xf32>
    %2 = tpu.iota {dimensions = array<i32: 1>} : vector<32x256xi32>
    %c16_i32 = arith.constant 16 : i32
    %c0_i32 = arith.constant 0 : i32
    %3 = arith.cmpi eq, %c16_i32, %c0_i32 : i32
    %c1_i32 = arith.constant 1 : i32
    %4 = arith.select %3, %c1_i32, %c16_i32 : i32
    %5 = vector.broadcast %4 : i32 to vector<32x256xi32>
    %6 = arith.remsi %2, %5 : vector<32x256xi32>
    %c0_i32_2 = arith.constant 0 : i32
    %7 = vector.broadcast %c0_i32_2 : i32 to vector<32x256xi32>
    %8 = arith.cmpi ne, %6, %7 : vector<32x256xi32>
    %c0_i32_3 = arith.constant 0 : i32
    %9 = vector.broadcast %c0_i32_3 : i32 to vector<32x256xi32>
    %10 = arith.cmpi slt, %6, %9 : vector<32x256xi32>
    %c0_i32_4 = arith.constant 0 : i32
    %11 = arith.cmpi slt, %4, %c0_i32_4 : i32
    %12 = vector.broadcast %11 : i1 to vector<32x256xi1>
    %13 = vector.broadcast %12 : vector<32x256xi1> to vector<32x256xi1>
    %14 = arith.xori %10, %13 : vector<32x256xi1>
    %15 = arith.andi %14, %8 : vector<32x256xi1>
    %16 = vector.broadcast %4 : i32 to vector<32x256xi32>
    %17 = arith.addi %6, %16 : vector<32x256xi32>
    %18 = arith.select %15, %17, %6 : vector<32x256xi1>, vector<32x256xi32>
    %c0_i32_5 = arith.constant 0 : i32
    %19 = vector.broadcast %c0_i32_5 : i32 to vector<32x256xi32>
    %20 = arith.cmpi eq, %18, %19 : vector<32x256xi32>
    %c15_i32 = arith.constant 15 : i32
    %21 = vector.broadcast %c15_i32 : i32 to vector<32x256xi32>
    %22 = arith.cmpi eq, %18, %21 : vector<32x256xi32>
    %c0_6 = arith.constant 0 : index
    %c0_7 = arith.constant 0 : index
    %c0_8 = arith.constant 0 : index
    %23 = vector.load %arg8[%c0_6, %c0_7, %c0_8] : memref<1x40x4xf32, #tpu.memory_space<vmem>>, vector<1x40x4xf32>
    %24 = vector.shape_cast %23 : vector<1x40x4xf32> to vector<40x4xf32>
    %25 = vector.extract_strided_slice %24 {offsets = [0, 0], sizes = [40, 1], strides = [1, 1]} : vector<40x4xf32> to vector<40x1xf32>
    %26 = vector.extract_strided_slice %24 {offsets = [0, 1], sizes = [40, 1], strides = [1, 1]} : vector<40x4xf32> to vector<40x1xf32>
    %27 = vector.extract_strided_slice %24 {offsets = [0, 2], sizes = [32, 1], strides = [1, 1]} : vector<40x4xf32> to vector<32x1xf32>
    %28 = vector.extract_strided_slice %24 {offsets = [0, 3], sizes = [32, 1], strides = [1, 1]} : vector<40x4xf32> to vector<32x1xf32>
    %29 = vector.extract_strided_slice %1 {offsets = [0, 16], sizes = [32, 16], strides = [1, 1]} : vector<32x256xf32> to vector<32x16xf32>
    %30 = vector.extract_strided_slice %1 {offsets = [0, 0], sizes = [32, 240], strides = [1, 1]} : vector<32x256xf32> to vector<32x240xf32>
    %31 = tpu.concatenate %29, %30 in 1 : vector<32x16xf32>, vector<32x240xf32> -> vector<32x256xf32>
    %32 = vector.extract_strided_slice %1 {offsets = [0, 16], sizes = [32, 240], strides = [1, 1]} : vector<32x256xf32> to vector<32x240xf32>
    %33 = vector.extract_strided_slice %1 {offsets = [0, 224], sizes = [32, 16], strides = [1, 1]} : vector<32x256xf32> to vector<32x16xf32>
    %34 = tpu.concatenate %32, %33 in 1 : vector<32x240xf32>, vector<32x16xf32> -> vector<32x256xf32>
    %35 = vector.extract_strided_slice %31 {offsets = [0, 1], sizes = [32, 255], strides = [1, 1]} : vector<32x256xf32> to vector<32x255xf32>
    %36 = vector.extract_strided_slice %31 {offsets = [0, 0], sizes = [32, 1], strides = [1, 1]} : vector<32x256xf32> to vector<32x1xf32>
    %37 = tpu.concatenate %35, %36 in 1 : vector<32x255xf32>, vector<32x1xf32> -> vector<32x256xf32>
    %38 = vector.extract_strided_slice %31 {offsets = [0, 255], sizes = [32, 1], strides = [1, 1]} : vector<32x256xf32> to vector<32x1xf32>
    %39 = vector.extract_strided_slice %31 {offsets = [0, 0], sizes = [32, 255], strides = [1, 1]} : vector<32x256xf32> to vector<32x255xf32>
    %40 = tpu.concatenate %38, %39 in 1 : vector<32x1xf32>, vector<32x255xf32> -> vector<32x256xf32>
    %41 = arith.select %20, %37, %40 : vector<32x256xi1>, vector<32x256xf32>
    %42 = arith.select %22, %40, %37 : vector<32x256xi1>, vector<32x256xf32>
    %43 = vector.extract_strided_slice %1 {offsets = [0, 1], sizes = [32, 255], strides = [1, 1]} : vector<32x256xf32> to vector<32x255xf32>
    %44 = vector.extract_strided_slice %1 {offsets = [0, 0], sizes = [32, 1], strides = [1, 1]} : vector<32x256xf32> to vector<32x1xf32>
    %45 = tpu.concatenate %43, %44 in 1 : vector<32x255xf32>, vector<32x1xf32> -> vector<32x256xf32>
    %46 = vector.extract_strided_slice %1 {offsets = [0, 255], sizes = [32, 1], strides = [1, 1]} : vector<32x256xf32> to vector<32x1xf32>
    %47 = vector.extract_strided_slice %1 {offsets = [0, 0], sizes = [32, 255], strides = [1, 1]} : vector<32x256xf32> to vector<32x255xf32>
    %48 = tpu.concatenate %46, %47 in 1 : vector<32x1xf32>, vector<32x255xf32> -> vector<32x256xf32>
    %49 = arith.select %20, %45, %48 : vector<32x256xi1>, vector<32x256xf32>
    %50 = arith.select %22, %48, %45 : vector<32x256xi1>, vector<32x256xf32>
    %51 = vector.extract_strided_slice %34 {offsets = [0, 1], sizes = [32, 255], strides = [1, 1]} : vector<32x256xf32> to vector<32x255xf32>
    %52 = vector.extract_strided_slice %34 {offsets = [0, 0], sizes = [32, 1], strides = [1, 1]} : vector<32x256xf32> to vector<32x1xf32>
    %53 = tpu.concatenate %51, %52 in 1 : vector<32x255xf32>, vector<32x1xf32> -> vector<32x256xf32>
    %54 = vector.extract_strided_slice %34 {offsets = [0, 255], sizes = [32, 1], strides = [1, 1]} : vector<32x256xf32> to vector<32x1xf32>
    %55 = vector.extract_strided_slice %34 {offsets = [0, 0], sizes = [32, 255], strides = [1, 1]} : vector<32x256xf32> to vector<32x255xf32>
    %56 = tpu.concatenate %54, %55 in 1 : vector<32x1xf32>, vector<32x255xf32> -> vector<32x256xf32>
    %57 = arith.select %20, %53, %56 : vector<32x256xi1>, vector<32x256xf32>
    %58 = arith.select %22, %56, %53 : vector<32x256xi1>, vector<32x256xf32>
    %59 = tpu.concatenate %41, %31, %42, %49, %1, %50, %57, %34, %58 in 0 : vector<32x256xf32>, vector<32x256xf32>, vector<32x256xf32>, vector<32x256xf32>, vector<32x256xf32>, vector<32x256xf32>, vector<32x256xf32>, vector<32x256xf32>, vector<32x256xf32> -> vector<288x256xf32>
    %c0_9 = arith.constant 0 : index
    %c0_10 = arith.constant 0 : index
    %60 = vector.load %arg2[%c0_9, %c0_10] : memref<32x288xf32, #tpu.memory_space<vmem>>, vector<32x288xf32>
    %cst = arith.constant dense<0.000000e+00> : vector<32x256xf32>
    %61 = tpu.matmul %60, %59, %cst {dimension_numbers = #tpu.dot_dimension_numbers<[1], [0], [0], [1], [0, 0, 1, 1], [], []>} : vector<32x288xf32>, vector<288x256xf32>, vector<32x256xf32> -> vector<32x256xf32>
    %cst_11 = arith.constant dense<0.000000e+00> : vector<32xf32>
    %62 = vector.multi_reduction <add>, %61, %cst_11 [1] : vector<32x256xf32> to vector<32xf32>
    %63 = vector.shape_cast %62 : vector<32xf32> to vector<32x1xf32>
    %64 = arith.mulf %61, %61 : vector<32x256xf32>
    %cst_12 = arith.constant dense<0.000000e+00> : vector<32xf32>
    %65 = vector.multi_reduction <add>, %64, %cst_12 [1] : vector<32x256xf32> to vector<32xf32>
    %66 = vector.shape_cast %65 : vector<32xf32> to vector<32x1xf32>
    %cst_13 = arith.constant 3.906250e-03 : f32
    %67 = vector.broadcast %cst_13 : f32 to vector<32x1xf32>
    %68 = arith.mulf %63, %67 : vector<32x1xf32>
    %cst_14 = arith.constant 3.906250e-03 : f32
    %69 = vector.broadcast %cst_14 : f32 to vector<32x1xf32>
    %70 = arith.mulf %66, %69 : vector<32x1xf32>
    %71 = arith.mulf %68, %68 : vector<32x1xf32>
    %72 = arith.subf %70, %71 : vector<32x1xf32>
    %73 = vector.broadcast %68 : vector<32x1xf32> to vector<32x256xf32>
    %74 = arith.subf %61, %73 : vector<32x256xf32>
    %cst_15 = arith.constant 9.99999974E-6 : f32
    %75 = vector.broadcast %cst_15 : f32 to vector<32x1xf32>
    %76 = arith.addf %72, %75 : vector<32x1xf32>
    %77 = math.rsqrt %76 : vector<32x1xf32>
    %78 = vector.broadcast %77 : vector<32x1xf32> to vector<32x256xf32>
    %79 = arith.mulf %74, %78 : vector<32x256xf32>
    %c0_16 = arith.constant 0 : index
    %c0_17 = arith.constant 0 : index
    %80 = vector.load %arg4[%c0_16, %c0_17] : memref<40x32xf32, #tpu.memory_space<vmem>>, vector<40x32xf32>
    %cst_18 = arith.constant dense<0.000000e+00> : vector<40x256xf32>
    %81 = tpu.matmul %80, %79, %cst_18 {dimension_numbers = #tpu.dot_dimension_numbers<[1], [0], [0], [1], [0, 0, 1, 1], [], []>} : vector<40x32xf32>, vector<32x256xf32>, vector<40x256xf32> -> vector<40x256xf32>
    %82 = vector.broadcast %25 : vector<40x1xf32> to vector<40x256xf32>
    %83 = arith.addf %81, %82 : vector<40x256xf32>
    %cst_19 = arith.constant 0.000000e+00 : f32
    %84 = vector.broadcast %cst_19 : f32 to vector<40x256xf32>
    %85 = arith.maximumf %83, %84 : vector<40x256xf32>
    %c0_20 = arith.constant 0 : index
    %c0_21 = arith.constant 0 : index
    %86 = vector.load %arg5[%c0_20, %c0_21] : memref<32x40xf32, #tpu.memory_space<vmem>>, vector<32x40xf32>
    %cst_22 = arith.constant dense<0.000000e+00> : vector<32x256xf32>
    %87 = tpu.matmul %86, %85, %cst_22 {dimension_numbers = #tpu.dot_dimension_numbers<[1], [0], [0], [1], [0, 0, 1, 1], [], []>} : vector<32x40xf32>, vector<40x256xf32>, vector<32x256xf32> -> vector<32x256xf32>
    %88 = vector.broadcast %27 : vector<32x1xf32> to vector<32x256xf32>
    %89 = arith.addf %87, %88 : vector<32x256xf32>
    %cst_23 = arith.constant 0.000000e+00 : f32
    %90 = vector.broadcast %cst_23 : f32 to vector<32x256xf32>
    %91 = arith.maximumf %89, %90 : vector<32x256xf32>
    %92 = vector.extract_strided_slice %91 {offsets = [0, 16], sizes = [32, 16], strides = [1, 1]} : vector<32x256xf32> to vector<32x16xf32>
    %93 = vector.extract_strided_slice %91 {offsets = [0, 0], sizes = [32, 240], strides = [1, 1]} : vector<32x256xf32> to vector<32x240xf32>
    %94 = tpu.concatenate %92, %93 in 1 : vector<32x16xf32>, vector<32x240xf32> -> vector<32x256xf32>
    %95 = vector.extract_strided_slice %91 {offsets = [0, 16], sizes = [32, 240], strides = [1, 1]} : vector<32x256xf32> to vector<32x240xf32>
    %96 = vector.extract_strided_slice %91 {offsets = [0, 224], sizes = [32, 16], strides = [1, 1]} : vector<32x256xf32> to vector<32x16xf32>
    %97 = tpu.concatenate %95, %96 in 1 : vector<32x240xf32>, vector<32x16xf32> -> vector<32x256xf32>
    %98 = vector.extract_strided_slice %94 {offsets = [0, 1], sizes = [32, 255], strides = [1, 1]} : vector<32x256xf32> to vector<32x255xf32>
    %99 = vector.extract_strided_slice %94 {offsets = [0, 0], sizes = [32, 1], strides = [1, 1]} : vector<32x256xf32> to vector<32x1xf32>
    %100 = tpu.concatenate %98, %99 in 1 : vector<32x255xf32>, vector<32x1xf32> -> vector<32x256xf32>
    %101 = vector.extract_strided_slice %94 {offsets = [0, 255], sizes = [32, 1], strides = [1, 1]} : vector<32x256xf32> to vector<32x1xf32>
    %102 = vector.extract_strided_slice %94 {offsets = [0, 0], sizes = [32, 255], strides = [1, 1]} : vector<32x256xf32> to vector<32x255xf32>
    %103 = tpu.concatenate %101, %102 in 1 : vector<32x1xf32>, vector<32x255xf32> -> vector<32x256xf32>
    %104 = arith.select %20, %100, %103 : vector<32x256xi1>, vector<32x256xf32>
    %105 = arith.select %22, %103, %100 : vector<32x256xi1>, vector<32x256xf32>
    %106 = vector.extract_strided_slice %91 {offsets = [0, 1], sizes = [32, 255], strides = [1, 1]} : vector<32x256xf32> to vector<32x255xf32>
    %107 = vector.extract_strided_slice %91 {offsets = [0, 0], sizes = [32, 1], strides = [1, 1]} : vector<32x256xf32> to vector<32x1xf32>
    %108 = tpu.concatenate %106, %107 in 1 : vector<32x255xf32>, vector<32x1xf32> -> vector<32x256xf32>
    %109 = vector.extract_strided_slice %91 {offsets = [0, 255], sizes = [32, 1], strides = [1, 1]} : vector<32x256xf32> to vector<32x1xf32>
    %110 = vector.extract_strided_slice %91 {offsets = [0, 0], sizes = [32, 255], strides = [1, 1]} : vector<32x256xf32> to vector<32x255xf32>
    %111 = tpu.concatenate %109, %110 in 1 : vector<32x1xf32>, vector<32x255xf32> -> vector<32x256xf32>
    %112 = arith.select %20, %108, %111 : vector<32x256xi1>, vector<32x256xf32>
    %113 = arith.select %22, %111, %108 : vector<32x256xi1>, vector<32x256xf32>
    %114 = vector.extract_strided_slice %97 {offsets = [0, 1], sizes = [32, 255], strides = [1, 1]} : vector<32x256xf32> to vector<32x255xf32>
    %115 = vector.extract_strided_slice %97 {offsets = [0, 0], sizes = [32, 1], strides = [1, 1]} : vector<32x256xf32> to vector<32x1xf32>
    %116 = tpu.concatenate %114, %115 in 1 : vector<32x255xf32>, vector<32x1xf32> -> vector<32x256xf32>
    %117 = vector.extract_strided_slice %97 {offsets = [0, 255], sizes = [32, 1], strides = [1, 1]} : vector<32x256xf32> to vector<32x1xf32>
    %118 = vector.extract_strided_slice %97 {offsets = [0, 0], sizes = [32, 255], strides = [1, 1]} : vector<32x256xf32> to vector<32x255xf32>
    %119 = tpu.concatenate %117, %118 in 1 : vector<32x1xf32>, vector<32x255xf32> -> vector<32x256xf32>
    %120 = arith.select %20, %116, %119 : vector<32x256xi1>, vector<32x256xf32>
    %121 = arith.select %22, %119, %116 : vector<32x256xi1>, vector<32x256xf32>
    %122 = tpu.concatenate %104, %94, %105, %112, %91, %113, %120, %97, %121 in 0 : vector<32x256xf32>, vector<32x256xf32>, vector<32x256xf32>, vector<32x256xf32>, vector<32x256xf32>, vector<32x256xf32>, vector<32x256xf32>, vector<32x256xf32>, vector<32x256xf32> -> vector<288x256xf32>
    %c0_24 = arith.constant 0 : index
    %c0_25 = arith.constant 0 : index
    %123 = vector.load %arg3[%c0_24, %c0_25] : memref<32x288xf32, #tpu.memory_space<vmem>>, vector<32x288xf32>
    %cst_26 = arith.constant dense<0.000000e+00> : vector<32x256xf32>
    %124 = tpu.matmul %123, %122, %cst_26 {dimension_numbers = #tpu.dot_dimension_numbers<[1], [0], [0], [1], [0, 0, 1, 1], [], []>} : vector<32x288xf32>, vector<288x256xf32>, vector<32x256xf32> -> vector<32x256xf32>
    %cst_27 = arith.constant dense<0.000000e+00> : vector<32xf32>
    %125 = vector.multi_reduction <add>, %124, %cst_27 [1] : vector<32x256xf32> to vector<32xf32>
    %126 = vector.shape_cast %125 : vector<32xf32> to vector<32x1xf32>
    %127 = arith.mulf %124, %124 : vector<32x256xf32>
    %cst_28 = arith.constant dense<0.000000e+00> : vector<32xf32>
    %128 = vector.multi_reduction <add>, %127, %cst_28 [1] : vector<32x256xf32> to vector<32xf32>
    %129 = vector.shape_cast %128 : vector<32xf32> to vector<32x1xf32>
    %cst_29 = arith.constant 3.906250e-03 : f32
    %130 = vector.broadcast %cst_29 : f32 to vector<32x1xf32>
    %131 = arith.mulf %126, %130 : vector<32x1xf32>
    %cst_30 = arith.constant 3.906250e-03 : f32
    %132 = vector.broadcast %cst_30 : f32 to vector<32x1xf32>
    %133 = arith.mulf %129, %132 : vector<32x1xf32>
    %134 = arith.mulf %131, %131 : vector<32x1xf32>
    %135 = arith.subf %133, %134 : vector<32x1xf32>
    %136 = vector.broadcast %131 : vector<32x1xf32> to vector<32x256xf32>
    %137 = arith.subf %124, %136 : vector<32x256xf32>
    %cst_31 = arith.constant 9.99999974E-6 : f32
    %138 = vector.broadcast %cst_31 : f32 to vector<32x1xf32>
    %139 = arith.addf %135, %138 : vector<32x1xf32>
    %140 = math.rsqrt %139 : vector<32x1xf32>
    %141 = vector.broadcast %140 : vector<32x1xf32> to vector<32x256xf32>
    %142 = arith.mulf %137, %141 : vector<32x256xf32>
    %c0_32 = arith.constant 0 : index
    %c0_33 = arith.constant 0 : index
    %143 = vector.load %arg6[%c0_32, %c0_33] : memref<40x32xf32, #tpu.memory_space<vmem>>, vector<40x32xf32>
    %cst_34 = arith.constant dense<0.000000e+00> : vector<40x256xf32>
    %144 = tpu.matmul %143, %142, %cst_34 {dimension_numbers = #tpu.dot_dimension_numbers<[1], [0], [0], [1], [0, 0, 1, 1], [], []>} : vector<40x32xf32>, vector<32x256xf32>, vector<40x256xf32> -> vector<40x256xf32>
    %145 = vector.broadcast %26 : vector<40x1xf32> to vector<40x256xf32>
    %146 = arith.addf %144, %145 : vector<40x256xf32>
    %cst_35 = arith.constant 0.000000e+00 : f32
    %147 = vector.broadcast %cst_35 : f32 to vector<40x256xf32>
    %148 = arith.maximumf %146, %147 : vector<40x256xf32>
    %c0_36 = arith.constant 0 : index
    %c0_37 = arith.constant 0 : index
    %149 = vector.load %arg7[%c0_36, %c0_37] : memref<32x40xf32, #tpu.memory_space<vmem>>, vector<32x40xf32>
    %cst_38 = arith.constant dense<0.000000e+00> : vector<32x256xf32>
    %150 = tpu.matmul %149, %148, %cst_38 {dimension_numbers = #tpu.dot_dimension_numbers<[1], [0], [0], [1], [0, 0, 1, 1], [], []>} : vector<32x40xf32>, vector<40x256xf32>, vector<32x256xf32> -> vector<32x256xf32>
    %151 = vector.broadcast %28 : vector<32x1xf32> to vector<32x256xf32>
    %152 = arith.addf %150, %151 : vector<32x256xf32>
    %cst_39 = arith.constant 0.000000e+00 : f32
    %153 = vector.broadcast %cst_39 : f32 to vector<32x256xf32>
    %154 = arith.maximumf %152, %153 : vector<32x256xf32>
    %155 = arith.addf %154, %1 : vector<32x256xf32>
    %c0_40 = arith.constant 0 : index
    %c0_41 = arith.constant 0 : index
    %c0_42 = arith.constant 0 : index
    %156 = vector.load %arg9[%c0_40, %c0_41, %c0_42] : memref<1x32x256xf32, #tpu.memory_space<vmem>>, vector<1x32x256xf32>
    %157 = vector.shape_cast %156 : vector<1x32x256xf32> to vector<32x256xf32>
    %158 = vector.shape_cast %155 : vector<32x256xf32> to vector<1x32x256xf32>
    tpu.vector_store %arg9[%c0_40, %c0_41, %c0_42], %158 {strides = array<i32>} : memref<1x32x256xf32, #tpu.memory_space<vmem>>, vector<1x32x256xf32>,
    return
  }
  func.func @transform_0(%arg0: i32) -> (i32, i32, i32) {
    %c0_i32 = arith.constant 0 : i32
    %c0_i32_0 = arith.constant 0 : i32
    %c0_i32_1 = arith.constant 0 : i32
    return %arg0, %c0_i32, %c0_i32_0 : i32, i32, i32
  }
  func.func @transform_1(%arg0: i32) -> (i32, i32) {
    %c0_i32 = arith.constant 0 : i32
    %c0_i32_0 = arith.constant 0 : i32
    %c0_i32_1 = arith.constant 0 : i32
    return %c0_i32, %c0_i32_0 : i32, i32
  }
  func.func @transform_2(%arg0: i32) -> (i32, i32) {
    %c0_i32 = arith.constant 0 : i32
    %c0_i32_0 = arith.constant 0 : i32
    %c0_i32_1 = arith.constant 0 : i32
    return %c0_i32, %c0_i32_0 : i32, i32
  }
  func.func @transform_3(%arg0: i32) -> (i32, i32) {
    %c0_i32 = arith.constant 0 : i32
    %c0_i32_0 = arith.constant 0 : i32
    %c0_i32_1 = arith.constant 0 : i32
    return %c0_i32, %c0_i32_0 : i32, i32
  }
  func.func @transform_4(%arg0: i32) -> (i32, i32) {
    %c0_i32 = arith.constant 0 : i32
    %c0_i32_0 = arith.constant 0 : i32
    %c0_i32_1 = arith.constant 0 : i32
    return %c0_i32, %c0_i32_0 : i32, i32
  }
  func.func @transform_5(%arg0: i32) -> (i32, i32) {
    %c0_i32 = arith.constant 0 : i32
    %c0_i32_0 = arith.constant 0 : i32
    %c0_i32_1 = arith.constant 0 : i32
    return %c0_i32, %c0_i32_0 : i32, i32
  }
  func.func @transform_6(%arg0: i32) -> (i32, i32) {
    %c0_i32 = arith.constant 0 : i32
    %c0_i32_0 = arith.constant 0 : i32
    %c0_i32_1 = arith.constant 0 : i32
    return %c0_i32, %c0_i32_0 : i32, i32
  }
  func.func @transform_7(%arg0: i32) -> (i32, i32, i32) {
    %c0_i32 = arith.constant 0 : i32
    %c0_i32_0 = arith.constant 0 : i32
    %c0_i32_1 = arith.constant 0 : i32
    return %arg0, %c0_i32, %c0_i32_0 : i32, i32, i32
  }
  func.func @transform_8(%arg0: i32) -> (i32, i32, i32) {
    %c0_i32 = arith.constant 0 : i32
    %c0_i32_0 = arith.constant 0 : i32
    %c0_i32_1 = arith.constant 0 : i32
    return %arg0, %c0_i32, %c0_i32_0 : i32, i32, i32
  }
}

</mosaic_0001>

<llo_original>
// kernel: tpu_custom_call.1
$region0: #{tpu_custom_call.1}
  #allocation0 [shape = 'u32[]', space=smem, size = 0x4, offset = 0x4, fixed_abs, tag = 'smem constant byte address 0x4 - core index']
  #allocation1 [shape = 'u32[144,128]{1,0:T(1,128)}', space=vmem, size = 0x12000, scoped, tag = 'internal scratch']
  %s0 = inlined_call_operand.vmem [shape: f32[2,32,256], index: 0, kind: input, shape index: {}]
  %s1 = inlined_call_operand.vmem [shape: f32[32,288], index: 1, kind: input, shape index: {}]
  %s2 = inlined_call_operand.hbm [shape: f32[32,288], index: 2, kind: input, shape index: {}]
  %s3 = inlined_call_operand.vmem [shape: f32[40,32], index: 3, kind: input, shape index: {}]
  %s4 = inlined_call_operand.hbm [shape: f32[32,40], index: 4, kind: input, shape index: {}]
  %s5 = inlined_call_operand.vmem [shape: f32[40,32], index: 5, kind: input, shape index: {}]
  %s6 = inlined_call_operand.hbm [shape: f32[32,40], index: 6, kind: input, shape index: {}]
  %s7 = inlined_call_operand.vmem [shape: f32[2,40,4], index: 7, kind: input, shape index: {}]
  %s8 = inlined_call_operand.hbm [shape: f32[2,32,256], index: 8, kind: output, shape index: {}]
  %s9 = sld [smem:[#allocation0]]
  $region77: #{tpu_custom_call.1} parent=0
    _
  %s11 = ssub.s32 1, %s9
  %s12 = scalar_select 0, %s11, %s9
  $region1: #{tpu_custom_call.1} parent=0
    #allocation2 [shape = 'u8[49152]{0}', space=vmem, size = 0xc000, scoped, tag = 'input window, operand 2, single buffered']
    #allocation3 [shape = 's32[2]{0}', space=sflag, size = 0x8, scoped, tag = 'scoped memory for tpu_custom_call.1']
    #allocation4 [shape = 's32[2]{0}', space=sflag, size = 0x8, scoped, tag = 'scoped memory for tpu_custom_call.1']
    #allocation5 [shape = 'u8[16384]{0}', space=vmem, size = 0x4000, scoped, tag = 'input window, operand 4, single buffered']
    #allocation6 [shape = 's32[1]{0}', space=sflag, size = 0x4, scoped, tag = 'scoped memory for tpu_custom_call.1']
    #allocation7 [shape = 'u8[16384]{0}', space=vmem, size = 0x4000, scoped, tag = 'input window, operand 6, single buffered']
    #allocation8 [shape = 'u8[65536]{0}', space=vmem, size = 0x10000, scoped, tag = 'output window, operand 0']
    %13 = vsyncpa [#allocation3], 0
    %14 = vsyncpa [#allocation6], 0
    %15 = vsyncpa [#allocation4], 0
    %s16 = scalar_lea.sflag [#allocation4], 1
    %17 = vsyncpa %s16, 0
    loop: start=0, step=1, limit=4
    $region2: #{tpu_custom_call.1} parent=1 // loop_pre_header
      _
    $region3: #{tpu_custom_call.1} parent=1 // loop_header
      %s19 = sphi 0, %s23
      %p20 = scmp.ge.s32.totalorder %s19, 4
      %s29 = sphi 0, %s31
      %s32 = sphi 0, %s29
      %s33 = sphi 0, %s32
      %s49 = sphi 0, %s33
      %s53 = sphi 0, %s53
      %s55 = sphi 0, %s53
      %s56 = sphi 0, %s55
      %s70 = sphi 0, %s56
      %s74 = sphi 0, %s74
      %s76 = sphi 0, %s74
      %s77 = sphi 0, %s76
      %s91 = sphi 0, %s77
      %s95 = sphi 0, %s95
      %s97 = sphi 0, %s95
      %s98 = sphi 0, %s97
      %s112 = sphi 0, %s98
      %s116 = sphi 0, %s116
      %s118 = sphi 0, %s116
      %s119 = sphi 0, %s118
      %s133 = sphi 0, %s119
      %s137 = sphi 0, %s137
      %s139 = sphi 0, %s137
      %s140 = sphi 0, %s139
      %s154 = sphi 0, %s140
      %s158 = sphi 0, %s158
      %s160 = sphi 0, %s158
      %s161 = sphi 0, %s160
      %s175 = sphi 0, %s161
      %s181 = sphi 0, %s183
      %s184 = sphi 0, %s181
      %s185 = sphi 0, %s184
      %s201 = sphi 0, %s185
      %s207 = sphi 0, %s209
      %s210 = sphi 0, %s207
      %s211 = sphi 0, %s210
      %s227 = sphi 0, %s211
    $region4: #{tpu_custom_call.1} parent=1 // loop_header_branch
      %22 = sbr.rel (%p20) target = $region8
    $region5: #{tpu_custom_call.1} parent=1 // loop_body
      %s24 = ssub.s32 %s19, 1
      %s25 = ssub.s32 %s19, 2
      %s26 = sadd.s32 %s19, 1
      %s27 = ssub.s32 %s19, %s26
      %p28 = scmp.eq.s32.totalorder %s27, 0
      %s30 = sadd.s32 %s29, 1
      %s31 = scalar_select %p28, %s29, %s30
      %p34 = pneg %p28
      %p35 = scmp.eq.s32.totalorder %s19, 1
      %p36 = por %p34, %p35
      %p37 = scmp.ne.s32.totalorder %s29, %s32
      %p38 = scmp.eq.s32.totalorder %s19, 0
      %p39 = por %p37, %p38
      %p40 = scmp.ne.s32.totalorder %s29, %s32
      %p41 = scmp.eq.s32.totalorder %s24, 1
      %p42 = por %p40, %p41
      %p43 = scmp.ne.s32.totalorder %s32, %s33
      %p44 = scmp.eq.s32.totalorder %s24, 0
      %p45 = por %p43, %p44
      %p46 = scmp.ne.s32.totalorder %s32, %s33
      %p47 = scmp.eq.s32.totalorder %s25, 1
      %p48 = por %p46, %p47
      %p50 = scmp.ne.s32.totalorder %s33, %s49
      %p51 = scmp.eq.s32.totalorder %s25, 0
      %p52 = por %p50, %p51
      %s54 = sadd.s32 %s53, 1
      %p57 = scmp.eq.s32.totalorder %s19, 1
      %p58 = scmp.ne.s32.totalorder %s53, %s55
      %p59 = scmp.eq.s32.totalorder %s19, 0
      %p60 = por %p58, %p59
      %p61 = scmp.ne.s32.totalorder %s53, %s55
      %p62 = scmp.eq.s32.totalorder %s24, 1
      %p63 = por %p61, %p62
      %p64 = scmp.ne.s32.totalorder %s55, %s56
      %p65 = scmp.eq.s32.totalorder %s24, 0
      %p66 = por %p64, %p65
      %p67 = scmp.ne.s32.totalorder %s55, %s56
      %p68 = scmp.eq.s32.totalorder %s25, 1
      %p69 = por %p67, %p68
      %p71 = scmp.ne.s32.totalorder %s56, %s70
      %p72 = scmp.eq.s32.totalorder %s25, 0
      %p73 = por %p71, %p72
      %s75 = sadd.s32 %s74, 1
      %p78 = scmp.eq.s32.totalorder %s19, 1
      %p79 = scmp.ne.s32.totalorder %s74, %s76
      %p80 = scmp.eq.s32.totalorder %s19, 0
      %p81 = por %p79, %p80
      %p82 = scmp.ne.s32.totalorder %s74, %s76
      %p83 = scmp.eq.s32.totalorder %s24, 1
      %p84 = por %p82, %p83
      %p85 = scmp.ne.s32.totalorder %s76, %s77
      %p86 = scmp.eq.s32.totalorder %s24, 0
      %p87 = por %p85, %p86
      %p88 = scmp.ne.s32.totalorder %s76, %s77
      %p89 = scmp.eq.s32.totalorder %s25, 1
      %p90 = por %p88, %p89
      %p92 = scmp.ne.s32.totalorder %s77, %s91
      %p93 = scmp.eq.s32.totalorder %s25, 0
      %p94 = por %p92, %p93
      %s96 = sadd.s32 %s95, 1
      %p99 = scmp.eq.s32.totalorder %s19, 1
      %p100 = scmp.ne.s32.totalorder %s95, %s97
      %p101 = scmp.eq.s32.totalorder %s19, 0
      %p102 = por %p100, %p101
      %p103 = scmp.ne.s32.totalorder %s95, %s97
      %p104 = scmp.eq.s32.totalorder %s24, 1
      %p105 = por %p103, %p104
      %p106 = scmp.ne.s32.totalorder %s97, %s98
      %p107 = scmp.eq.s32.totalorder %s24, 0
      %p108 = por %p106, %p107
      %p109 = scmp.ne.s32.totalorder %s97, %s98
      %p110 = scmp.eq.s32.totalorder %s25, 1
      %p111 = por %p109, %p110
      %p113 = scmp.ne.s32.totalorder %s98, %s112
      %p114 = scmp.eq.s32.totalorder %s25, 0
      %p115 = por %p113, %p114
      %s117 = sadd.s32 %s116, 1
      %p120 = scmp.eq.s32.totalorder %s19, 1
      %p121 = scmp.ne.s32.totalorder %s116, %s118
      %p122 = scmp.eq.s32.totalorder %s19, 0
      %p123 = por %p121, %p122
      %p124 = scmp.ne.s32.totalorder %s116, %s118
      %p125 = scmp.eq.s32.totalorder %s24, 1
      %p126 = por %p124, %p125
      %p127 = scmp.ne.s32.totalorder %s118, %s119
      %p128 = scmp.eq.s32.totalorder %s24, 0
      %p129 = por %p127, %p128
      %p130 = scmp.ne.s32.totalorder %s118, %s119
      %p131 = scmp.eq.s32.totalorder %s25, 1
      %p132 = por %p130, %p131
      %p134 = scmp.ne.s32.totalorder %s119, %s133
      %p135 = scmp.eq.s32.totalorder %s25, 0
      %p136 = por %p134, %p135
      %s138 = sadd.s32 %s137, 1
      %p141 = scmp.eq.s32.totalorder %s19, 1
      %p142 = scmp.ne.s32.totalorder %s137, %s139
      %p143 = scmp.eq.s32.totalorder %s19, 0
      %p144 = por %p142, %p143
      %p145 = scmp.ne.s32.totalorder %s137, %s139
      %p146 = scmp.eq.s32.totalorder %s24, 1
      %p147 = por %p145, %p146
      %p148 = scmp.ne.s32.totalorder %s139, %s140
      %p149 = scmp.eq.s32.totalorder %s24, 0
      %p150 = por %p148, %p149
      %p151 = scmp.ne.s32.totalorder %s139, %s140
      %p152 = scmp.eq.s32.totalorder %s25, 1
      %p153 = por %p151, %p152
      %p155 = scmp.ne.s32.totalorder %s140, %s154
      %p156 = scmp.eq.s32.totalorder %s25, 0
      %p157 = por %p155, %p156
      %s159 = sadd.s32 %s158, 1
      %p162 = scmp.eq.s32.totalorder %s19, 1
      %p163 = scmp.ne.s32.totalorder %s158, %s160
      %p164 = scmp.eq.s32.totalorder %s19, 0
      %p165 = por %p163, %p164
      %p166 = scmp.ne.s32.totalorder %s158, %s160
      %p167 = scmp.eq.s32.totalorder %s24, 1
      %p168 = por %p166, %p167
      %p169 = scmp.ne.s32.totalorder %s160, %s161
      %p170 = scmp.eq.s32.totalorder %s24, 0
      %p171 = por %p169, %p170
      %p172 = scmp.ne.s32.totalorder %s160, %s161
      %p173 = scmp.eq.s32.totalorder %s25, 1
      %p174 = por %p172, %p173
      %p176 = scmp.ne.s32.totalorder %s161, %s175
      %p177 = scmp.eq.s32.totalorder %s25, 0
      %p178 = por %p176, %p177
      %s179 = ssub.s32 %s19, %s26
      %p180 = scmp.eq.s32.totalorder %s179, 0
      %s182 = sadd.s32 %s181, 1
      %s183 = scalar_select %p180, %s181, %s182
      %p186 = pneg %p180
      %p187 = scmp.eq.s32.totalorder %s19, 1
      %p188 = por %p186, %p187
      %p189 = scmp.ne.s32.totalorder %s181, %s184
      %p190 = scmp.eq.s32.totalorder %s19, 0
      %p191 = por %p189, %p190
      %p192 = scmp.ne.s32.totalorder %s181, %s184
      %p193 = scmp.eq.s32.totalorder %s24, 1
      %p194 = por %p192, %p193
      %p195 = scmp.ne.s32.totalorder %s184, %s185
      %p196 = scmp.eq.s32.totalorder %s24, 0
      %p197 = por %p195, %p196
      %p198 = scmp.ne.s32.totalorder %s184, %s185
      %p199 = scmp.eq.s32.totalorder %s25, 1
      %p200 = por %p198, %p199
      %p202 = scmp.ne.s32.totalorder %s185, %s201
      %p203 = scmp.eq.s32.totalorder %s25, 0
      %p204 = por %p202, %p203
      %s205 = ssub.s32 %s19, %s26
      %p206 = scmp.eq.s32.totalorder %s205, 0
      %s208 = sadd.s32 %s207, 1
      %s209 = scalar_select %p206, %s207, %s208
      %p212 = pneg %p206
      %p213 = scmp.eq.s32.totalorder %s19, 1
      %p214 = por %p212, %p213
      %p215 = scmp.ne.s32.totalorder %s207, %s210
      %p216 = scmp.eq.s32.totalorder %s19, 0
      %p217 = por %p215, %p216
      %p218 = scmp.ne.s32.totalorder %s207, %s210
      %p219 = scmp.eq.s32.totalorder %s24, 1
      %p220 = por %p218, %p219
      %p221 = scmp.ne.s32.totalorder %s210, %s211
      %p222 = scmp.eq.s32.totalorder %s24, 0
      %p223 = por %p221, %p222
      %p224 = scmp.ne.s32.totalorder %s210, %s211
      %p225 = scmp.eq.s32.totalorder %s25, 1
      %p226 = por %p224, %p225
      %p228 = scmp.ne.s32.totalorder %s211, %s227
      %p229 = scmp.eq.s32.totalorder %s25, 0
      %p230 = por %p228, %p229
      %p231 = scmp.le.s32.totalorder 1, %s19
      %p232 = scmp.lt.s32.totalorder %s19, 3
      %p233 = pnand %p231, %p232
      %p234 = pneg %p233
      // Predicated region
      $region9: #{tpu_custom_call.1} parent=5 // pred_check
        _
      $region10: #{tpu_custom_call.1} parent=5 // pred_check_branch
        %236 = sbr.rel (%p233) target = $region12
      $region11: #{tpu_custom_call.1} parent=5 // pred_region
        %s237 = ssub.s32 %s19, 1
        // Predicated region
        $region13: #{tpu_custom_call.1} parent=11 // pred_check
          %p238 = pneg %p66
        $region14: #{tpu_custom_call.1} parent=11 // pred_check_branch
          %240 = sbr.rel (%p238) target = $region16
        $region15: #{tpu_custom_call.1} parent=11 // pred_region
          _
        $region16: #{tpu_custom_call.1} parent=11 // pred_fallthru
          _
        // Predicated region
        $region17: #{tpu_custom_call.1} parent=11 // pred_check
          %p241 = pneg %p87
        $region18: #{tpu_custom_call.1} parent=11 // pred_check_branch
          %243 = sbr.rel (%p241) target = $region20
        $region19: #{tpu_custom_call.1} parent=11 // pred_region
          %s245 = ssub.s32 1536, 1536
          %246 = vsyncadd [#allocation3], %s245
          %s247 = sshll.u32 [#allocation2], 4
          %s248 = int_to_ptr.vmem [resolvable:$true] %s247
          %253 = dma.hbm_to_vmem [thread:$0]  %s2, 1536, %s248, [#allocation3], 384, 384, 24
        $region20: #{tpu_custom_call.1} parent=11 // pred_fallthru
          _
        // Predicated region
        $region21: #{tpu_custom_call.1} parent=11 // pred_check
          %p254 = pneg %p108
        $region22: #{tpu_custom_call.1} parent=11 // pred_check_branch
          %256 = sbr.rel (%p254) target = $region24
        $region23: #{tpu_custom_call.1} parent=11 // pred_region
          _
        $region24: #{tpu_custom_call.1} parent=11 // pred_fallthru
          _
        // Predicated region
        $region25: #{tpu_custom_call.1} parent=11 // pred_check
          %p257 = pneg %p129
        $region26: #{tpu_custom_call.1} parent=11 // pred_check_branch
          %259 = sbr.rel (%p257) target = $region28
        $region27: #{tpu_custom_call.1} parent=11 // pred_region
          %s261 = ssub.s32 512, 512
          %262 = vsyncadd [#allocation6], %s261
          %s263 = sshll.u32 [#allocation5], 4
          %s264 = int_to_ptr.vmem [resolvable:$true] %s263
          %269 = dma.hbm_to_vmem [thread:$0]  %s4, 512, %s264, [#allocation6], 128, 128, 8
        $region28: #{tpu_custom_call.1} parent=11 // pred_fallthru
          _
        // Predicated region
        $region29: #{tpu_custom_call.1} parent=11 // pred_check
          %p270 = pneg %p150
        $region30: #{tpu_custom_call.1} parent=11 // pred_check_branch
          %272 = sbr.rel (%p270) target = $region32
        $region31: #{tpu_custom_call.1} parent=11 // pred_region
          _
        $region32: #{tpu_custom_call.1} parent=11 // pred_fallthru
          _
        // Predicated region
        $region33: #{tpu_custom_call.1} parent=11 // pred_check
          %p273 = pneg %p171
        $region34: #{tpu_custom_call.1} parent=11 // pred_check_branch
          %275 = sbr.rel (%p273) target = $region36
        $region35: #{tpu_custom_call.1} parent=11 // pred_region
          %s277 = ssub.s32 512, 512
          %278 = vsyncadd [#allocation6], %s277
          %s279 = sshll.u32 [#allocation7], 4
          %s280 = int_to_ptr.vmem [resolvable:$true] %s279
          %285 = dma.hbm_to_vmem [thread:$0]  %s6, 512, %s280, [#allocation6], 128, 128, 8
        $region36: #{tpu_custom_call.1} parent=11 // pred_fallthru
          _
      $region12: #{tpu_custom_call.1} parent=5 // pred_fallthru
        _
      %p286 = scmp.lt.s32.totalorder %s19, 2
      // Predicated region
      $region37: #{tpu_custom_call.1} parent=5 // pred_check
        %p287 = pneg %p286
      $region38: #{tpu_custom_call.1} parent=5 // pred_check_branch
        %289 = sbr.rel (%p287) target = $region40
      $region39: #{tpu_custom_call.1} parent=5 // pred_region
        // Predicated region
        $region41: #{tpu_custom_call.1} parent=39 // pred_check
          %p290 = pneg %p39
        $region42: #{tpu_custom_call.1} parent=39 // pred_check_branch
          %292 = sbr.rel (%p290) target = $region44
        $region43: #{tpu_custom_call.1} parent=39 // pred_region
          %p293 = scmp.lt.s32.totalorder %s19, 1
          %s294 = scalar_select %p293, %s19, 1
          %s295 = smul.addr %s294, 8
          %s296 = smul.addr %s295, 8
          %s297 = scalar_lea.vmem %s0, %s296
        $region44: #{tpu_custom_call.1} parent=39 // pred_fallthru
          _
        // Predicated region
        $region45: #{tpu_custom_call.1} parent=39 // pred_check
          %p298 = pneg %p191
        $region46: #{tpu_custom_call.1} parent=39 // pred_check_branch
          %300 = sbr.rel (%p298) target = $region48
        $region47: #{tpu_custom_call.1} parent=39 // pred_region
          %p301 = scmp.lt.s32.totalorder %s19, 1
          %s302 = scalar_select %p301, %s19, 1
          %s303 = smul.addr %s302, 5
          %s304 = smul.addr %s303, 8
          %s305 = scalar_lea.vmem %s7, %s304
        $region48: #{tpu_custom_call.1} parent=39 // pred_fallthru
          _
      $region40: #{tpu_custom_call.1} parent=5 // pred_fallthru
        _
      %p306 = scmp.le.s32.totalorder 1, %s19
      %p307 = scmp.lt.s32.totalorder %s19, 3
      %p308 = pnand %p306, %p307
      %p309 = pneg %p308
      // Predicated region
      $region49: #{tpu_custom_call.1} parent=5 // pred_check
        _
      $region50: #{tpu_custom_call.1} parent=5 // pred_check_branch
        %311 = sbr.rel (%p308) target = $region52
      $region51: #{tpu_custom_call.1} parent=5 // pred_region
        %s312 = ssub.s32 %s19, 1
        // Predicated region
        $region53: #{tpu_custom_call.1} parent=51 // pred_check
          %p313 = pneg %p87
        $region54: #{tpu_custom_call.1} parent=51 // pred_check_branch
          %315 = sbr.rel (%p313) target = $region56
        $region55: #{tpu_custom_call.1} parent=51 // pred_region
          %316 = dma.done [#allocation3], 1536
        $region56: #{tpu_custom_call.1} parent=51 // pred_fallthru
          _
        // Predicated region
        $region57: #{tpu_custom_call.1} parent=51 // pred_check
          %p317 = pneg %p129
        $region58: #{tpu_custom_call.1} parent=51 // pred_check_branch
          %319 = sbr.rel (%p317) target = $region60
        $region59: #{tpu_custom_call.1} parent=51 // pred_region
          %320 = dma.done [#allocation6], 512
        $region60: #{tpu_custom_call.1} parent=51 // pred_fallthru
          _
        // Predicated region
        $region61: #{tpu_custom_call.1} parent=51 // pred_check
          %p321 = pneg %p171
        $region62: #{tpu_custom_call.1} parent=51 // pred_check_branch
          %323 = sbr.rel (%p321) target = $region64
        $region63: #{tpu_custom_call.1} parent=51 // pred_region
          %324 = dma.done [#allocation6], 512
        $region64: #{tpu_custom_call.1} parent=51 // pred_fallthru
          _
        %p325 = scmp.lt.s32.totalorder %s24, 1
        %s326 = scalar_select %p325, %s24, 1
        %s327 = smul.addr %s326, 8
        %s328 = smul.addr %s327, 8
        %s329 = scalar_lea.vmem %s0, %s328
        %p330 = pneg %p45
        %p331 = pneg %p42
        %p332 = pneg %p66
        %p333 = pneg %p63
        %p334 = pneg %p87
        %p335 = pneg %p84
        %p336 = pneg %p108
        %p337 = pneg %p105
        %p338 = pneg %p129
        %p339 = pneg %p126
        %p340 = pneg %p150
        %p341 = pneg %p147
        %p342 = pneg %p171
        %p343 = pneg %p168
        %p344 = scmp.lt.s32.totalorder %s24, 1
        %s345 = scalar_select %p344, %s24, 1
        %s346 = smul.addr %s345, 5
        %s347 = smul.addr %s346, 8
        %s348 = scalar_lea.vmem %s7, %s347
        %p349 = pneg %p197
        %p350 = pneg %p194
        %p351 = pneg %p223
        %p352 = pneg %p220
        %s353 = sand.u32 %s210, 1
        %s354 = scalar_lea.sflag [#allocation4], %s353
        %s355 = sand.u32 %s210, 1
        %s356 = smul.addr %s355, 64
        %s357 = scalar_lea.vmem [#allocation8], %s356
        %p358 = scmp.lt.s32.totalorder %s24, 1
        %s359 = scalar_select %p358, %s24, 1
        %s360 = smul.addr %s359, 8
        %s361 = smul.addr %s360, 8
        %s362 = scalar_lea.vmem %s0, %s361
        %p363 = scmp.lt.s32.totalorder %s24, 1
        %s364 = scalar_select %p363, %s24, 1
        %s365 = smul.addr %s364, 5
        %s366 = smul.addr %s365, 8
        %s367 = scalar_lea.vmem %s7, %s366
        %v368 = vld [vmem:[%s362] sm:$0xff]
        %v369 = vld [vmem:[%s362 + $0x8] sm:$0xff]
        %v370 = vld [vmem:[%s362 + $0x10] sm:$0xff]
        %v371 = vld [vmem:[%s362 + $0x18] sm:$0xff]
        %v372 = vld [vmem:[%s362 + $0x20] sm:$0xff]
        %v373 = vld [vmem:[%s362 + $0x28] sm:$0xff]
        %v374 = vld [vmem:[%s362 + $0x30] sm:$0xff]
        %v375 = vld [vmem:[%s362 + $0x38] sm:$0xff]
        %v376 = vlaneseq
        %v377 = vand.u32 %v376, 127
        %v378 = vadd.s32 %v377, 128
        %vm379 = vcmp.lt.s32.totalorder %v377, 0
        %v380 = vsub.s32 0, %v377
        %v381 = vsel %vm379, %v380, %v377
        %v382 = vshrl.u32 %v381, 4
        %v383 = vand.u32 %v381, 15
        %v384 = vsub.s32 0, %v383
        %v385 = vsel %vm379, %v384, %v383
        %vm386 = vcmp.lt.s32.totalorder %v378, 0
        %v387 = vsub.s32 0, %v378
        %v388 = vsel %vm386, %v387, %v378
        %v389 = vshrl.u32 %v388, 4
        %v390 = vand.u32 %v388, 15
        %v391 = vsub.s32 0, %v390
        %v392 = vsel %vm386, %v391, %v390
        %vm393 = vcmp.ne.s32.totalorder %v385, 0
        %vm394 = vcmp.ne.s32.totalorder %v392, 0
        %vm395 = vcmp.lt.s32.totalorder %v385, 0
        %vm396 = vcmp.lt.s32.totalorder %v392, 0
        %vm397 = vmand %vm395, %vm393
        %vm398 = vmand %vm396, %vm394
        %v399 = vadd.s32 %v385, 16
        %v400 = vadd.s32 %v392, 16
        %v401 = vsel %vm397, %v399, %v385
        %v402 = vsel %vm398, %v400, %v392
        %vm403 = vcmp.eq.s32.totalorder %v401, 0
        %vm404 = vcmp.eq.s32.totalorder %v402, 0
        %vm405 = vcmp.eq.s32.totalorder %v401, 15
        %vm406 = vcmp.eq.s32.totalorder %v402, 15
        %v407 = vld [vmem:[%s367] sm:$0xff]
        %v408 = vld [vmem:[%s367 + $0x8] sm:$0xff]
        %v409 = vld [vmem:[%s367 + $0x10] sm:$0xff]
        %v410 = vld [vmem:[%s367 + $0x18] sm:$0xff]
        %v411 = vld [vmem:[%s367 + $0x20] sm:$0xff]
        %416 = vrot.lane.b32.xlu0 %v368, 112
        %v417 = vpop.permute.xlu0 %416
        %418 = vrot.lane.b32.xlu0 %v370, 112
        %v419 = vpop.permute.xlu0 %418
        %420 = vrot.lane.b32.xlu0 %v372, 112
        %v421 = vpop.permute.xlu0 %420
        %422 = vrot.lane.b32.xlu0 %v374, 112
        %v423 = vpop.permute.xlu0 %422
        %432 = vrot.lane.b32.xlu0 %v368, 16
        %v433 = vpop.permute.xlu0 %432
        %434 = vrot.lane.b32.xlu0 %v369, 16
        %v435 = vpop.permute.xlu0 %434
        %436 = vrot.lane.b32.xlu0 %v370, 16
        %v437 = vpop.permute.xlu0 %436
        %438 = vrot.lane.b32.xlu0 %v371, 16
        %v439 = vpop.permute.xlu0 %438
        %440 = vrot.lane.b32.xlu0 %v372, 16
        %v441 = vpop.permute.xlu0 %440
        %442 = vrot.lane.b32.xlu0 %v373, 16
        %v443 = vpop.permute.xlu0 %442
        %444 = vrot.lane.b32.xlu0 %v374, 16
        %v445 = vpop.permute.xlu0 %444
        %446 = vrot.lane.b32.xlu0 %v375, 16
        %v447 = vpop.permute.xlu0 %446
        %vm448 = vcmask 130048
        %v449 = vsel %vm448, %v433, %v435
        %v450 = vsel %vm448, %v437, %v439
        %v451 = vsel %vm448, %v441, %v443
        %v452 = vsel %vm448, %v445, %v447
        %v461 = vsel %vm448, %v417, %v433
        %v462 = vsel %vm448, %v419, %v437
        %v463 = vsel %vm448, %v421, %v441
        %v464 = vsel %vm448, %v423, %v445
        %465 = vrot.lane.b32.xlu0 %v369, 112
        %v466 = vpop.permute.xlu0 %465
        %467 = vrot.lane.b32.xlu0 %v371, 112
        %v468 = vpop.permute.xlu0 %467
        %469 = vrot.lane.b32.xlu0 %v373, 112
        %v470 = vpop.permute.xlu0 %469
        %471 = vrot.lane.b32.xlu0 %v375, 112
        %v472 = vpop.permute.xlu0 %471
        %vm473 = vcmask 916480
        %v474 = vsel %vm473, %v417, %v466
        %v475 = vsel %vm473, %v419, %v468
        %v476 = vsel %vm473, %v421, %v470
        %v477 = vsel %vm473, %v423, %v472
        %v490 = vsel %vm473, %v466, %v435
        %v491 = vsel %vm473, %v468, %v439
        %v492 = vsel %vm473, %v470, %v443
        %v493 = vsel %vm473, %v472, %v447
        %498 = vrot.lane.b32.xlu0 %v461, 127
        %v499 = vpop.permute.xlu0 %498
        %500 = vrot.lane.b32.xlu0 %v449, 127
        %v501 = vpop.permute.xlu0 %500
        %502 = vrot.lane.b32.xlu0 %v462, 127
        %v503 = vpop.permute.xlu0 %502
        %504 = vrot.lane.b32.xlu0 %v450, 127
        %v505 = vpop.permute.xlu0 %504
        %506 = vrot.lane.b32.xlu0 %v463, 127
        %v507 = vpop.permute.xlu0 %506
        %508 = vrot.lane.b32.xlu0 %v451, 127
        %v509 = vpop.permute.xlu0 %508
        %510 = vrot.lane.b32.xlu0 %v464, 127
        %v511 = vpop.permute.xlu0 %510
        %512 = vrot.lane.b32.xlu0 %v452, 127
        %v513 = vpop.permute.xlu0 %512
        %vm514 = vcmask 1039360
        %v515 = vsel %vm514, %v499, %v501
        %v516 = vsel %vm514, %v503, %v505
        %v517 = vsel %vm514, %v507, %v509
        %v518 = vsel %vm514, %v511, %v513
        %v531 = vsel %vm514, %v501, %v499
        %v532 = vsel %vm514, %v505, %v503
        %v533 = vsel %vm514, %v509, %v507
        %v534 = vsel %vm514, %v513, %v511
        %535 = vrot.lane.b32.xlu0 %v449, 1
        %v536 = vpop.permute.xlu0 %535
        %537 = vrot.lane.b32.xlu0 %v450, 1
        %v538 = vpop.permute.xlu0 %537
        %539 = vrot.lane.b32.xlu0 %v451, 1
        %v540 = vpop.permute.xlu0 %539
        %541 = vrot.lane.b32.xlu0 %v452, 1
        %v542 = vpop.permute.xlu0 %541
        %547 = vrot.lane.b32.xlu0 %v461, 1
        %v548 = vpop.permute.xlu0 %547
        %549 = vrot.lane.b32.xlu0 %v462, 1
        %v550 = vpop.permute.xlu0 %549
        %551 = vrot.lane.b32.xlu0 %v463, 1
        %v552 = vpop.permute.xlu0 %551
        %553 = vrot.lane.b32.xlu0 %v464, 1
        %v554 = vpop.permute.xlu0 %553
        %vm555 = vcmask 7168
        %v556 = vsel %vm555, %v548, %v536
        %v557 = vsel %vm555, %v550, %v538
        %v558 = vsel %vm555, %v552, %v540
        %v559 = vsel %vm555, %v554, %v542
        %v568 = vsel %vm555, %v536, %v548
        %v569 = vsel %vm555, %v538, %v550
        %v570 = vsel %vm555, %v540, %v552
        %v571 = vsel %vm555, %v542, %v554
        %v572 = vsel %vm403, %v515, %v568
        %v573 = vsel %vm404, %v531, %v556
        %v574 = vsel %vm403, %v516, %v569
        %v575 = vsel %vm404, %v532, %v557
        %v576 = vsel %vm403, %v517, %v570
        %v577 = vsel %vm404, %v533, %v558
        %v578 = vsel %vm403, %v518, %v571
        %v579 = vsel %vm404, %v534, %v559
        %v580 = vsel %vm405, %v568, %v515
        %v581 = vsel %vm406, %v556, %v531
        %v582 = vsel %vm405, %v569, %v516
        %v583 = vsel %vm406, %v557, %v532
        %v584 = vsel %vm405, %v570, %v517
        %v585 = vsel %vm406, %v558, %v533
        %v586 = vsel %vm405, %v571, %v518
        %v587 = vsel %vm406, %v559, %v534
        %588 = vrot.lane.b32.xlu0 %v368, 127
        %v589 = vpop.permute.xlu0 %588
        %590 = vrot.lane.b32.xlu0 %v369, 127
        %v591 = vpop.permute.xlu0 %590
        %592 = vrot.lane.b32.xlu0 %v370, 127
        %v593 = vpop.permute.xlu0 %592
        %594 = vrot.lane.b32.xlu0 %v371, 127
        %v595 = vpop.permute.xlu0 %594
        %596 = vrot.lane.b32.xlu0 %v372, 127
        %v597 = vpop.permute.xlu0 %596
        %598 = vrot.lane.b32.xlu0 %v373, 127
        %v599 = vpop.permute.xlu0 %598
        %600 = vrot.lane.b32.xlu0 %v374, 127
        %v601 = vpop.permute.xlu0 %600
        %602 = vrot.lane.b32.xlu0 %v375, 127
        %v603 = vpop.permute.xlu0 %602
        %v604 = vsel %vm514, %v589, %v591
        %v605 = vsel %vm514, %v593, %v595
        %v606 = vsel %vm514, %v597, %v599
        %v607 = vsel %vm514, %v601, %v603
        %v620 = vsel %vm514, %v591, %v589
        %v621 = vsel %vm514, %v595, %v593
        %v622 = vsel %vm514, %v599, %v597
        %v623 = vsel %vm514, %v603, %v601
        %624 = vrot.lane.b32.xlu0 %v369, 1
        %v625 = vpop.permute.xlu0 %624
        %626 = vrot.lane.b32.xlu0 %v371, 1
        %v627 = vpop.permute.xlu0 %626
        %628 = vrot.lane.b32.xlu0 %v373, 1
        %v629 = vpop.permute.xlu0 %628
        %630 = vrot.lane.b32.xlu0 %v375, 1
        %v631 = vpop.permute.xlu0 %630
        %636 = vrot.lane.b32.xlu0 %v368, 1
        %v637 = vpop.permute.xlu0 %636
        %638 = vrot.lane.b32.xlu0 %v370, 1
        %v639 = vpop.permute.xlu0 %638
        %640 = vrot.lane.b32.xlu0 %v372, 1
        %v641 = vpop.permute.xlu0 %640
        %642 = vrot.lane.b32.xlu0 %v374, 1
        %v643 = vpop.permute.xlu0 %642
        %v644 = vsel %vm555, %v637, %v625
        %v645 = vsel %vm555, %v639, %v627
        %v646 = vsel %vm555, %v641, %v629
        %v647 = vsel %vm555, %v643, %v631
        %v656 = vsel %vm555, %v625, %v637
        %v657 = vsel %vm555, %v627, %v639
        %v658 = vsel %vm555, %v629, %v641
        %v659 = vsel %vm555, %v631, %v643
        %v660 = vsel %vm403, %v604, %v656
        %v661 = vsel %vm404, %v620, %v644
        %v662 = vsel %vm403, %v605, %v657
        %v663 = vsel %vm404, %v621, %v645
        %v664 = vsel %vm403, %v606, %v658
        %v665 = vsel %vm404, %v622, %v646
        %v666 = vsel %vm403, %v607, %v659
        %v667 = vsel %vm404, %v623, %v647
        %v668 = vsel %vm405, %v656, %v604
        %v669 = vsel %vm406, %v644, %v620
        %v670 = vsel %vm405, %v657, %v605
        %v671 = vsel %vm406, %v645, %v621
        %v672 = vsel %vm405, %v658, %v606
        %v673 = vsel %vm406, %v646, %v622
        %v674 = vsel %vm405, %v659, %v607
        %v675 = vsel %vm406, %v647, %v623
        %680 = vrot.lane.b32.xlu0 %v474, 127
        %v681 = vpop.permute.xlu0 %680
        %682 = vrot.lane.b32.xlu0 %v490, 127
        %v683 = vpop.permute.xlu0 %682
        %684 = vrot.lane.b32.xlu0 %v475, 127
        %v685 = vpop.permute.xlu0 %684
        %686 = vrot.lane.b32.xlu0 %v491, 127
        %v687 = vpop.permute.xlu0 %686
        %688 = vrot.lane.b32.xlu0 %v476, 127
        %v689 = vpop.permute.xlu0 %688
        %690 = vrot.lane.b32.xlu0 %v492, 127
        %v691 = vpop.permute.xlu0 %690
        %692 = vrot.lane.b32.xlu0 %v477, 127
        %v693 = vpop.permute.xlu0 %692
        %694 = vrot.lane.b32.xlu0 %v493, 127
        %v695 = vpop.permute.xlu0 %694
        %v696 = vsel %vm514, %v681, %v683
        %v697 = vsel %vm514, %v685, %v687
        %v698 = vsel %vm514, %v689, %v691
        %v699 = vsel %vm514, %v693, %v695
        %v712 = vsel %vm514, %v683, %v681
        %v713 = vsel %vm514, %v687, %v685
        %v714 = vsel %vm514, %v691, %v689
        %v715 = vsel %vm514, %v695, %v693
        %716 = vrot.lane.b32.xlu0 %v490, 1
        %v717 = vpop.permute.xlu0 %716
        %718 = vrot.lane.b32.xlu0 %v491, 1
        %v719 = vpop.permute.xlu0 %718
        %720 = vrot.lane.b32.xlu0 %v492, 1
        %v721 = vpop.permute.xlu0 %720
        %722 = vrot.lane.b32.xlu0 %v493, 1
        %v723 = vpop.permute.xlu0 %722
        %728 = vrot.lane.b32.xlu0 %v474, 1
        %v729 = vpop.permute.xlu0 %728
        %730 = vrot.lane.b32.xlu0 %v475, 1
        %v731 = vpop.permute.xlu0 %730
        %732 = vrot.lane.b32.xlu0 %v476, 1
        %v733 = vpop.permute.xlu0 %732
        %734 = vrot.lane.b32.xlu0 %v477, 1
        %v735 = vpop.permute.xlu0 %734
        %v736 = vsel %vm555, %v729, %v717
        %v737 = vsel %vm555, %v731, %v719
        %v738 = vsel %vm555, %v733, %v721
        %v739 = vsel %vm555, %v735, %v723
        %v748 = vsel %vm555, %v717, %v729
        %v749 = vsel %vm555, %v719, %v731
        %v750 = vsel %vm555, %v721, %v733
        %v751 = vsel %vm555, %v723, %v735
        %v752 = vsel %vm403, %v696, %v748
        %v753 = vsel %vm404, %v712, %v736
        %v754 = vsel %vm403, %v697, %v749
        %v755 = vsel %vm404, %v713, %v737
        %v756 = vsel %vm403, %v698, %v750
        %v757 = vsel %vm404, %v714, %v738
        %v758 = vsel %vm403, %v699, %v751
        %v759 = vsel %vm404, %v715, %v739
        %v760 = vsel %vm405, %v748, %v696
        %v761 = vsel %vm406, %v736, %v712
        %v762 = vsel %vm405, %v749, %v697
        %v763 = vsel %vm406, %v737, %v713
        %v764 = vsel %vm405, %v750, %v698
        %v765 = vsel %vm406, %v738, %v714
        %v766 = vsel %vm405, %v751, %v699
        %v767 = vsel %vm406, %v739, %v715
        %v768 = vld [vmem:[%s1] sm:$0xff]
        %v769 = vld [vmem:[%s1 + $0x8] sm:$0xff]
        %v770 = vld [vmem:[%s1 + $0x10] sm:$0xff]
        %v771 = vld [vmem:[%s1 + $0x18] sm:$0xff]
        %v772 = vld [vmem:[%s1 + $0x20] sm:$0xff]
        %v773 = vld [vmem:[%s1 + $0x28] sm:$0xff]
        %v774 = vld [vmem:[%s1 + $0x30] sm:$0xff]
        %v775 = vld [vmem:[%s1 + $0x38] sm:$0xff]
        %v776 = vld [vmem:[%s1 + $0x40] sm:$0xff]
        %v777 = vld [vmem:[%s1 + $0x48] sm:$0xff]
        %v778 = vld [vmem:[%s1 + $0x50] sm:$0xff]
        %v779 = vld [vmem:[%s1 + $0x58] sm:$0xff]
        %vm780 = vcmask 261120
        %v782 = vsel %vm780, %v770, 0
        %v785 = vsel %vm780, %v773, 0
        %v788 = vsel %vm780, %v776, 0
        %v791 = vsel %vm780, %v779, 0
        %793 = vmatprep.subr.mxu0 %v573
        %794 = vmatpush1.msra.mxu0 %v572
        %795 = vmatprep.subr.mxu0 %v575
        %796 = vmatpush1.msra.mxu0 %v574
        %797 = vmatprep.subr.mxu0 %v577
        %798 = vmatpush1.msra.mxu0 %v576
        %799 = vmatprep.subr.mxu0 %v579
        %800 = vmatpush1.msra.mxu0 %v578
        %801 = vmatprep.subr.mxu0 %v449
        %802 = vmatpush1.msra.mxu0 %v461
        %803 = vmatprep.subr.mxu0 %v450
        %804 = vmatpush1.msra.mxu0 %v462
        %805 = vmatprep.subr.mxu0 %v451
        %806 = vmatpush1.msra.mxu0 %v463
        %807 = vmatprep.subr.mxu0 %v452
        %808 = vmatpush1.msra.mxu0 %v464
        %809 = vmatprep.subr.mxu0 %v581
        %810 = vmatpush1.msra.mxu0 %v580
        %811 = vmatprep.subr.mxu0 %v583
        %812 = vmatpush1.msra.mxu0 %v582
        %813 = vmatprep.subr.mxu0 %v585
        %814 = vmatpush1.msra.mxu0 %v584
        %815 = vmatprep.subr.mxu0 %v587
        %816 = vmatpush1.msra.mxu0 %v586
        %817 = vmatprep.subr.mxu0 %v661
        %818 = vmatpush1.msra.mxu0 %v660
        %819 = vmatprep.subr.mxu0 %v663
        %820 = vmatpush1.msra.mxu0 %v662
        %821 = vmatprep.subr.mxu0 %v665
        %822 = vmatpush1.msra.mxu0 %v664
        %823 = vmatprep.subr.mxu0 %v667
        %824 = vmatpush1.msra.mxu0 %v666
        %825 = vmatprep.subr.mxu0 %v369
        %826 = vmatpush1.msra.mxu0 %v368
        %827 = vmatprep.subr.mxu0 %v371
        %828 = vmatpush1.msra.mxu0 %v370
        %829 = vmatprep.subr.mxu0 %v373
        %830 = vmatpush1.msra.mxu0 %v372
        %831 = vmatprep.subr.mxu0 %v375
        %832 = vmatpush1.msra.mxu0 %v374
        %833 = vmatprep.subr.mxu0 %v669
        %834 = vmatpush1.msra.mxu0 %v668
        %835 = vmatprep.subr.mxu0 %v671
        %836 = vmatpush1.msra.mxu0 %v670
        %837 = vmatprep.subr.mxu0 %v673
        %838 = vmatpush1.msra.mxu0 %v672
        %839 = vmatprep.subr.mxu0 %v675
        %840 = vmatpush1.msra.mxu0 %v674
        %841 = vmatprep.subr.mxu0 %v753
        %842 = vmatpush1.msra.mxu0 %v752
        %843 = vmatprep.subr.mxu0 %v755
        %844 = vmatpush1.msra.mxu0 %v754
        %845 = vmatprep.subr.mxu0 %v757
        %846 = vmatpush1.msra.mxu0 %v756
        %847 = vmatprep.subr.mxu0 %v759
        %848 = vmatpush1.msra.mxu0 %v758
        %849 = vmatprep.subr.mxu0 %v490
        %850 = vmatpush1.msra.mxu0 %v474
        %851 = vmatprep.subr.mxu0 %v491
        %852 = vmatpush1.msra.mxu0 %v475
        %853 = vmatprep.subr.mxu0 %v492
        %854 = vmatpush1.msra.mxu0 %v476
        %855 = vmatprep.subr.mxu0 %v493
        %856 = vmatpush1.msra.mxu0 %v477
        %857 = vmatprep.mubr.f32.mxu0 %v769
        %858 = vmatmul.mubr.f32.gmra.mrb[0].mxu0 %v768
        %v859 = vpop.f32.mrb[0].mxu0
        %v860 = vadd.f32 0.0, %v859
        %v861 = vpop.f32.mrb[0].mxu0
        %v862 = vadd.f32 0.0, %v861
        %863 = vmatprep.mubr.f32.mxu0 %v772
        %864 = vmatmul.mubr.f32.gmra.mrb[0].mxu0 %v771
        %v865 = vpop.f32.mrb[0].mxu0
        %v866 = vadd.f32 0.0, %v865
        %v867 = vpop.f32.mrb[0].mxu0
        %v868 = vadd.f32 0.0, %v867
        %869 = vmatprep.mubr.f32.mxu0 %v775
        %870 = vmatmul.mubr.f32.gmra.mrb[0].mxu0 %v774
        %v871 = vpop.f32.mrb[0].mxu0
        %v872 = vadd.f32 0.0, %v871
        %v873 = vpop.f32.mrb[0].mxu0
        %v874 = vadd.f32 0.0, %v873
        %875 = vmatprep.mubr.f32.mxu0 %v778
        %876 = vmatmul.mubr.f32.gmra.mrb[0].mxu0 %v777
        %v877 = vpop.f32.mrb[0].mxu0
        %v878 = vadd.f32 0.0, %v877
        %v879 = vpop.f32.mrb[0].mxu0
        %v880 = vadd.f32 0.0, %v879
        %881 = vdwg.mxu0
        %882 = vmatprep.subr.mxu0 %v761
        %883 = vmatpush1.msra.mxu0 %v760
        %884 = vmatprep.subr.mxu0 %v763
        %885 = vmatpush1.msra.mxu0 %v762
        %886 = vmatprep.subr.mxu0 %v765
        %887 = vmatpush1.msra.mxu0 %v764
        %888 = vmatprep.subr.mxu0 %v767
        %889 = vmatpush1.msra.mxu0 %v766
        %890 = vmatprep.subr.mxu0 0.0
        %891 = vmatpush1.msra.mxu0 0.0
        %892 = vmatprep.subr.mxu0 0.0
        %893 = vmatpush1.msra.mxu0 0.0
        %894 = vmatprep.subr.mxu0 0.0
        %895 = vmatpush1.msra.mxu0 0.0
        %896 = vmatprep.subr.mxu0 0.0
        %897 = vmatpush1.msra.mxu0 0.0
        %898 = vmatprep.subr.mxu0 0.0
        %899 = vmatpush1.msra.mxu0 0.0
        %900 = vmatprep.subr.mxu0 0.0
        %901 = vmatpush1.msra.mxu0 0.0
        %902 = vmatprep.subr.mxu0 0.0
        %903 = vmatpush1.msra.mxu0 0.0
        %904 = vmatprep.subr.mxu0 0.0
        %905 = vmatpush1.msra.mxu0 0.0
        %906 = vmatprep.subr.mxu0 0.0
        %907 = vmatpush1.msra.mxu0 0.0
        %908 = vmatprep.subr.mxu0 0.0
        %909 = vmatpush1.msra.mxu0 0.0
        %910 = vmatprep.subr.mxu0 0.0
        %911 = vmatpush1.msra.mxu0 0.0
        %912 = vmatprep.subr.mxu0 0.0
        %913 = vmatpush1.msra.mxu0 0.0
        %914 = vmatprep.subr.mxu0 0.0
        %915 = vmatpush1.msra.mxu0 0.0
        %916 = vmatprep.subr.mxu0 0.0
        %917 = vmatpush1.msra.mxu0 0.0
        %918 = vmatprep.subr.mxu0 0.0
        %919 = vmatpush1.msra.mxu0 0.0
        %920 = vmatprep.subr.mxu0 0.0
        %921 = vmatpush1.msra.mxu0 0.0
        %922 = vmatprep.subr.mxu0 0.0
        %923 = vmatpush1.msra.mxu0 0.0
        %924 = vmatprep.subr.mxu0 0.0
        %925 = vmatpush1.msra.mxu0 0.0
        %926 = vmatprep.subr.mxu0 0.0
        %927 = vmatpush1.msra.mxu0 0.0
        %928 = vmatprep.subr.mxu0 0.0
        %929 = vmatpush1.msra.mxu0 0.0
        %930 = vmatprep.subr.mxu0 0.0
        %931 = vmatpush1.msra.mxu0 0.0
        %932 = vmatprep.subr.mxu0 0.0
        %933 = vmatpush1.msra.mxu0 0.0
        %934 = vmatprep.subr.mxu0 0.0
        %935 = vmatpush1.msra.mxu0 0.0
        %936 = vmatprep.subr.mxu0 0.0
        %937 = vmatpush1.msra.mxu0 0.0
        %938 = vmatprep.subr.mxu0 0.0
        %939 = vmatpush1.msra.mxu0 0.0
        %940 = vmatprep.subr.mxu0 0.0
        %941 = vmatpush1.msra.mxu0 0.0
        %942 = vmatprep.subr.mxu0 0.0
        %943 = vmatpush1.msra.mxu0 0.0
        %944 = vmatprep.subr.mxu0 0.0
        %945 = vmatpush1.msra.mxu0 0.0
        %946 = vmatprep.mubr.f32.mxu0 0.0
        %947 = vmatmul.mubr.f32.gmra.mrb[0].mxu0 %v782
        %v948 = vpop.f32.mrb[0].mxu0
        %v949 = vadd.f32 %v860, %v948
        %v950 = vpop.f32.mrb[0].mxu0
        %v951 = vadd.f32 %v862, %v950
        %952 = vmatprep.mubr.f32.mxu0 0.0
        %953 = vmatmul.mubr.f32.gmra.mrb[0].mxu0 %v785
        %v954 = vpop.f32.mrb[0].mxu0
        %v955 = vadd.f32 %v866, %v954
        %v956 = vpop.f32.mrb[0].mxu0
        %v957 = vadd.f32 %v868, %v956
        %958 = vmatprep.mubr.f32.mxu0 0.0
        %959 = vmatmul.mubr.f32.gmra.mrb[0].mxu0 %v788
        %v960 = vpop.f32.mrb[0].mxu0
        %v961 = vadd.f32 %v872, %v960
        %v962 = vpop.f32.mrb[0].mxu0
        %v963 = vadd.f32 %v874, %v962
        %964 = vmatprep.mubr.f32.mxu0 0.0
        %965 = vmatmul.mubr.f32.gmra.mrb[0].mxu0 %v791
        %v966 = vpop.f32.mrb[0].mxu0
        %v967 = vadd.f32 %v878, %v966
        %v968 = vpop.f32.mrb[0].mxu0
        %v969 = vadd.f32 %v880, %v968
        %970 = vdwg.mxu0
        %v971 = vadd.f32 %v949, %v951
        %972 = vadd.xlane.f32.xlu0 %v971
        %v973 = vpop.xlane.xlu0 %972
        %v974 = vadd.f32 %v955, %v957
        %975 = vadd.xlane.f32.xlu0 %v974
        %v976 = vpop.xlane.xlu0 %975
        %v977 = vadd.f32 %v961, %v963
        %978 = vadd.xlane.f32.xlu0 %v977
        %v979 = vpop.xlane.xlu0 %978
        %v980 = vadd.f32 %v967, %v969
        %981 = vadd.xlane.f32.xlu0 %v980
        %v982 = vpop.xlane.xlu0 %981
        %v983 = vmul.f32 %v949, %v949
        %v984 = vmul.f32 %v951, %v951
        %v985 = vmul.f32 %v955, %v955
        %v986 = vmul.f32 %v957, %v957
        %v987 = vmul.f32 %v961, %v961
        %v988 = vmul.f32 %v963, %v963
        %v989 = vmul.f32 %v967, %v967
        %v990 = vmul.f32 %v969, %v969
        %v991 = vadd.f32 %v983, %v984
        %992 = vadd.xlane.f32.xlu0 %v991
        %v993 = vpop.xlane.xlu0 %992
        %v994 = vadd.f32 %v985, %v986
        %995 = vadd.xlane.f32.xlu0 %v994
        %v996 = vpop.xlane.xlu0 %995
        %v997 = vadd.f32 %v987, %v988
        %998 = vadd.xlane.f32.xlu0 %v997
        %v999 = vpop.xlane.xlu0 %998
        %v1000 = vadd.f32 %v989, %v990
        %1001 = vadd.xlane.f32.xlu0 %v1000
        %v1002 = vpop.xlane.xlu0 %1001
        %v1003 = vmul.f32 %v973, 0.00390625
        %v1004 = vmul.f32 %v976, 0.00390625
        %v1005 = vmul.f32 %v979, 0.00390625
        %v1006 = vmul.f32 %v982, 0.00390625
        %v1007 = vmul.f32 %v993, 0.00390625
        %v1008 = vmul.f32 %v996, 0.00390625
        %v1009 = vmul.f32 %v999, 0.00390625
        %v1010 = vmul.f32 %v1002, 0.00390625
        %v1011 = vmul.f32 %v1003, %v1003
        %v1012 = vmul.f32 %v1004, %v1004
        %v1013 = vmul.f32 %v1005, %v1005
        %v1014 = vmul.f32 %v1006, %v1006
        %v1015 = vsub.f32 %v1007, %v1011
        %v1016 = vsub.f32 %v1008, %v1012
        %v1017 = vsub.f32 %v1009, %v1013
        %v1018 = vsub.f32 %v1010, %v1014
        %v1019 = vsub.f32 %v949, %v1003
        %v1020 = vsub.f32 %v951, %v1003
        %v1021 = vsub.f32 %v955, %v1004
        %v1022 = vsub.f32 %v957, %v1004
        %v1023 = vsub.f32 %v961, %v1005
        %v1024 = vsub.f32 %v963, %v1005
        %v1025 = vsub.f32 %v967, %v1006
        %v1026 = vsub.f32 %v969, %v1006
        %v1027 = vadd.f32 %v1015, 1e-05
        %v1028 = vadd.f32 %v1016, 1e-05
        %v1029 = vadd.f32 %v1017, 1e-05
        %v1030 = vadd.f32 %v1018, 1e-05
        %v1031 = vrsqrt.pop %v1027
        %v1032 = vrsqrt.pop %v1028
        %v1033 = vrsqrt.pop %v1029
        %v1034 = vrsqrt.pop %v1030
        %v1035 = vmul.f32 %v1019, %v1031
        %v1036 = vmul.f32 %v1020, %v1031
        %v1037 = vmul.f32 %v1021, %v1032
        %v1038 = vmul.f32 %v1022, %v1032
        %v1039 = vmul.f32 %v1023, %v1033
        %v1040 = vmul.f32 %v1024, %v1033
        %v1041 = vmul.f32 %v1025, %v1034
        %v1042 = vmul.f32 %v1026, %v1034
        %v1043 = vld [vmem:[%s3] sm:$0xff]
        %v1044 = vld [vmem:[%s3 + $0x8] sm:$0xff]
        %v1045 = vld [vmem:[%s3 + $0x10] sm:$0xff]
        %v1046 = vld [vmem:[%s3 + $0x18] sm:$0xff]
        %v1047 = vld [vmem:[%s3 + $0x20] sm:$0xff]
        %1049 = vset.pattern.permute.xlu0 0
        %1050 = vperm.xlu0 %1049, %v407
        %v1051 = vpop.permute.xlu0 %1050
        %1054 = vset.pattern.permute.xlu0 0
        %1055 = vperm.xlu0 %1054, %v408
        %v1056 = vpop.permute.xlu0 %1055
        %1059 = vset.pattern.permute.xlu0 0
        %1060 = vperm.xlu0 %1059, %v409
        %v1061 = vpop.permute.xlu0 %1060
        %1064 = vset.pattern.permute.xlu0 0
        %1065 = vperm.xlu0 %1064, %v410
        %v1066 = vpop.permute.xlu0 %1065
        %1069 = vset.pattern.permute.xlu0 0
        %1070 = vperm.xlu0 %1069, %v411
        %v1071 = vpop.permute.xlu0 %1070
        %v1074 = vsel %vm780, %v1043, 0
        %v1077 = vsel %vm780, %v1044, 0
        %v1080 = vsel %vm780, %v1045, 0
        %v1083 = vsel %vm780, %v1046, 0
        %v1086 = vsel %vm780, %v1047, 0
        %1088 = vmatprep.subr.mxu0 %v1036
        %1089 = vmatpush1.msra.mxu0 %v1035
        %1090 = vmatprep.subr.mxu0 %v1038
        %1091 = vmatpush1.msra.mxu0 %v1037
        %1092 = vmatprep.subr.mxu0 %v1040
        %1093 = vmatpush1.msra.mxu0 %v1039
        %1094 = vmatprep.subr.mxu0 %v1042
        %1095 = vmatpush1.msra.mxu0 %v1041
        %1096 = vmatprep.subr.mxu0 0.0
        %1097 = vmatpush1.msra.mxu0 0.0
        %1098 = vmatprep.subr.mxu0 0.0
        %1099 = vmatpush1.msra.mxu0 0.0
        %1100 = vmatprep.subr.mxu0 0.0
        %1101 = vmatpush1.msra.mxu0 0.0
        %1102 = vmatprep.subr.mxu0 0.0
        %1103 = vmatpush1.msra.mxu0 0.0
        %1104 = vmatprep.subr.mxu0 0.0
        %1105 = vmatpush1.msra.mxu0 0.0
        %1106 = vmatprep.subr.mxu0 0.0
        %1107 = vmatpush1.msra.mxu0 0.0
        %1108 = vmatprep.subr.mxu0 0.0
        %1109 = vmatpush1.msra.mxu0 0.0
        %1110 = vmatprep.subr.mxu0 0.0
        %1111 = vmatpush1.msra.mxu0 0.0
        %1112 = vmatprep.subr.mxu0 0.0
        %1113 = vmatpush1.msra.mxu0 0.0
        %1114 = vmatprep.subr.mxu0 0.0
        %1115 = vmatpush1.msra.mxu0 0.0
        %1116 = vmatprep.subr.mxu0 0.0
        %1117 = vmatpush1.msra.mxu0 0.0
        %1118 = vmatprep.subr.mxu0 0.0
        %1119 = vmatpush1.msra.mxu0 0.0
        %1120 = vmatprep.subr.mxu0 0.0
        %1121 = vmatpush1.msra.mxu0 0.0
        %1122 = vmatprep.subr.mxu0 0.0
        %1123 = vmatpush1.msra.mxu0 0.0
        %1124 = vmatprep.subr.mxu0 0.0
        %1125 = vmatpush1.msra.mxu0 0.0
        %1126 = vmatprep.subr.mxu0 0.0
        %1127 = vmatpush1.msra.mxu0 0.0
        %1128 = vmatprep.subr.mxu0 0.0
        %1129 = vmatpush1.msra.mxu0 0.0
        %1130 = vmatprep.subr.mxu0 0.0
        %1131 = vmatpush1.msra.mxu0 0.0
        %1132 = vmatprep.subr.mxu0 0.0
        %1133 = vmatpush1.msra.mxu0 0.0
        %1134 = vmatprep.subr.mxu0 0.0
        %1135 = vmatpush1.msra.mxu0 0.0
        %1136 = vmatprep.subr.mxu0 0.0
        %1137 = vmatpush1.msra.mxu0 0.0
        %1138 = vmatprep.subr.mxu0 0.0
        %1139 = vmatpush1.msra.mxu0 0.0
        %1140 = vmatprep.subr.mxu0 0.0
        %1141 = vmatpush1.msra.mxu0 0.0
        %1142 = vmatprep.subr.mxu0 0.0
        %1143 = vmatpush1.msra.mxu0 0.0
        %1144 = vmatprep.subr.mxu0 0.0
        %1145 = vmatpush1.msra.mxu0 0.0
        %1146 = vmatprep.subr.mxu0 0.0
        %1147 = vmatpush1.msra.mxu0 0.0
        %1148 = vmatprep.subr.mxu0 0.0
        %1149 = vmatpush1.msra.mxu0 0.0
        %1150 = vmatprep.subr.mxu0 0.0
        %1151 = vmatpush1.msra.mxu0 0.0
        %1152 = vmatprep.mubr.f32.mxu0 0.0
        %1153 = vmatmul.mubr.f32.gmra.mrb[0].mxu0 %v1074
        %v1154 = vpop.f32.mrb[0].mxu0
        %v1155 = vadd.f32 %v1051, %v1154
        %v1156 = vpop.f32.mrb[0].mxu0
        %v1157 = vadd.f32 %v1051, %v1156
        %1158 = vmatprep.mubr.f32.mxu0 0.0
        %1159 = vmatmul.mubr.f32.gmra.mrb[0].mxu0 %v1077
        %v1160 = vpop.f32.mrb[0].mxu0
        %v1161 = vadd.f32 %v1056, %v1160
        %v1162 = vpop.f32.mrb[0].mxu0
        %v1163 = vadd.f32 %v1056, %v1162
        %1164 = vmatprep.mubr.f32.mxu0 0.0
        %1165 = vmatmul.mubr.f32.gmra.mrb[0].mxu0 %v1080
        %v1166 = vpop.f32.mrb[0].mxu0
        %v1167 = vadd.f32 %v1061, %v1166
        %v1168 = vpop.f32.mrb[0].mxu0
        %v1169 = vadd.f32 %v1061, %v1168
        %1170 = vmatprep.mubr.f32.mxu0 0.0
        %1171 = vmatmul.mubr.f32.gmra.mrb[0].mxu0 %v1083
        %v1172 = vpop.f32.mrb[0].mxu0
        %v1173 = vadd.f32 %v1066, %v1172
        %v1174 = vpop.f32.mrb[0].mxu0
        %v1175 = vadd.f32 %v1066, %v1174
        %1176 = vmatprep.mubr.f32.mxu0 0.0
        %1177 = vmatmul.mubr.f32.gmra.mrb[0].mxu0 %v1086
        %v1178 = vpop.f32.mrb[0].mxu0
        %v1179 = vadd.f32 %v1071, %v1178
        %v1180 = vpop.f32.mrb[0].mxu0
        %v1181 = vadd.f32 %v1071, %v1180
        %1182 = vdwg.mxu0
        %v1183 = vmax.f32 %v1155, 0.0
        %v1184 = vmax.f32 %v1157, 0.0
        %v1185 = vmax.f32 %v1161, 0.0
        %v1186 = vmax.f32 %v1163, 0.0
        %v1187 = vmax.f32 %v1167, 0.0
        %v1188 = vmax.f32 %v1169, 0.0
        %v1189 = vmax.f32 %v1173, 0.0
        %v1190 = vmax.f32 %v1175, 0.0
        %v1191 = vmax.f32 %v1179, 0.0
        %v1192 = vmax.f32 %v1181, 0.0
        %v1193 = vld [vmem:[#allocation5] sm:$0xff]
        %v1194 = vld [vmem:[#allocation5 + $0x8] sm:$0xff]
        %v1195 = vld [vmem:[#allocation5 + $0x10] sm:$0xff]
        %v1196 = vld [vmem:[#allocation5 + $0x18] sm:$0xff]
        %1197 = vset.pattern.permute.xlu0 2
        %1198 = vperm.xlu0 %1197, %v407
        %v1199 = vpop.permute.xlu0 %1198
        %1201 = vset.pattern.permute.xlu0 2
        %1202 = vperm.xlu0 %1201, %v408
        %v1203 = vpop.permute.xlu0 %1202
        %1205 = vset.pattern.permute.xlu0 2
        %1206 = vperm.xlu0 %1205, %v409
        %v1207 = vpop.permute.xlu0 %1206
        %1209 = vset.pattern.permute.xlu0 2
        %1210 = vperm.xlu0 %1209, %v410
        %v1211 = vpop.permute.xlu0 %1210
        %vm1213 = vcmask 326656
        %v1215 = vsel %vm1213, %v1193, 0
        %v1218 = vsel %vm1213, %v1194, 0
        %v1221 = vsel %vm1213, %v1195, 0
        %v1224 = vsel %vm1213, %v1196, 0
        %1226 = vmatprep.subr.mxu0 %v1184
        %1227 = vmatpush1.msra.mxu0 %v1183
        %1228 = vmatprep.subr.mxu0 %v1186
        %1229 = vmatpush1.msra.mxu0 %v1185
        %1230 = vmatprep.subr.mxu0 %v1188
        %1231 = vmatpush1.msra.mxu0 %v1187
        %1232 = vmatprep.subr.mxu0 %v1190
        %1233 = vmatpush1.msra.mxu0 %v1189
        %1234 = vmatprep.subr.mxu0 %v1192
        %1235 = vmatpush1.msra.mxu0 %v1191
        %1236 = vmatprep.subr.mxu0 0.0
        %1237 = vmatpush1.msra.mxu0 0.0
        %1238 = vmatprep.subr.mxu0 0.0
        %1239 = vmatpush1.msra.mxu0 0.0
        %1240 = vmatprep.subr.mxu0 0.0
        %1241 = vmatpush1.msra.mxu0 0.0
        %1242 = vmatprep.subr.mxu0 0.0
        %1243 = vmatpush1.msra.mxu0 0.0
        %1244 = vmatprep.subr.mxu0 0.0
        %1245 = vmatpush1.msra.mxu0 0.0
        %1246 = vmatprep.subr.mxu0 0.0
        %1247 = vmatpush1.msra.mxu0 0.0
        %1248 = vmatprep.subr.mxu0 0.0
        %1249 = vmatpush1.msra.mxu0 0.0
        %1250 = vmatprep.subr.mxu0 0.0
        %1251 = vmatpush1.msra.mxu0 0.0
        %1252 = vmatprep.subr.mxu0 0.0
        %1253 = vmatpush1.msra.mxu0 0.0
        %1254 = vmatprep.subr.mxu0 0.0
        %1255 = vmatpush1.msra.mxu0 0.0
        %1256 = vmatprep.subr.mxu0 0.0
        %1257 = vmatpush1.msra.mxu0 0.0
        %1258 = vmatprep.subr.mxu0 0.0
        %1259 = vmatpush1.msra.mxu0 0.0
        %1260 = vmatprep.subr.mxu0 0.0
        %1261 = vmatpush1.msra.mxu0 0.0
        %1262 = vmatprep.subr.mxu0 0.0
        %1263 = vmatpush1.msra.mxu0 0.0
        %1264 = vmatprep.subr.mxu0 0.0
        %1265 = vmatpush1.msra.mxu0 0.0
        %1266 = vmatprep.subr.mxu0 0.0
        %1267 = vmatpush1.msra.mxu0 0.0
        %1268 = vmatprep.subr.mxu0 0.0
        %1269 = vmatpush1.msra.mxu0 0.0
        %1270 = vmatprep.subr.mxu0 0.0
        %1271 = vmatpush1.msra.mxu0 0.0
        %1272 = vmatprep.subr.mxu0 0.0
        %1273 = vmatpush1.msra.mxu0 0.0
        %1274 = vmatprep.subr.mxu0 0.0
        %1275 = vmatpush1.msra.mxu0 0.0
        %1276 = vmatprep.subr.mxu0 0.0
        %1277 = vmatpush1.msra.mxu0 0.0
        %1278 = vmatprep.subr.mxu0 0.0
        %1279 = vmatpush1.msra.mxu0 0.0
        %1280 = vmatprep.subr.mxu0 0.0
        %1281 = vmatpush1.msra.mxu0 0.0
        %1282 = vmatprep.subr.mxu0 0.0
        %1283 = vmatpush1.msra.mxu0 0.0
        %1284 = vmatprep.subr.mxu0 0.0
        %1285 = vmatpush1.msra.mxu0 0.0
        %1286 = vmatprep.subr.mxu0 0.0
        %1287 = vmatpush1.msra.mxu0 0.0
        %1288 = vmatprep.subr.mxu0 0.0
        %1289 = vmatpush1.msra.mxu0 0.0
        %1290 = vmatprep.mubr.f32.mxu0 0.0
        %1291 = vmatmul.mubr.f32.gmra.mrb[0].mxu0 %v1215
        %v1292 = vpop.f32.mrb[0].mxu0
        %v1293 = vadd.f32 %v1199, %v1292
        %v1294 = vpop.f32.mrb[0].mxu0
        %v1295 = vadd.f32 %v1199, %v1294
        %1296 = vmatprep.mubr.f32.mxu0 0.0
        %1297 = vmatmul.mubr.f32.gmra.mrb[0].mxu0 %v1218
        %v1298 = vpop.f32.mrb[0].mxu0
        %v1299 = vadd.f32 %v1203, %v1298
        %v1300 = vpop.f32.mrb[0].mxu0
        %v1301 = vadd.f32 %v1203, %v1300
        %1302 = vmatprep.mubr.f32.mxu0 0.0
        %1303 = vmatmul.mubr.f32.gmra.mrb[0].mxu0 %v1221
        %v1304 = vpop.f32.mrb[0].mxu0
        %v1305 = vadd.f32 %v1207, %v1304
        %v1306 = vpop.f32.mrb[0].mxu0
        %v1307 = vadd.f32 %v1207, %v1306
        %1308 = vmatprep.mubr.f32.mxu0 0.0
        %1309 = vmatmul.mubr.f32.gmra.mrb[0].mxu0 %v1224
        %v1310 = vpop.f32.mrb[0].mxu0
        %v1311 = vadd.f32 %v1211, %v1310
        %v1312 = vpop.f32.mrb[0].mxu0
        %v1313 = vadd.f32 %v1211, %v1312
        %1314 = vdwg.mxu0
        %v1315 = vmax.f32 %v1293, 0.0
        %v1316 = vmax.f32 %v1295, 0.0
        %v1317 = vmax.f32 %v1299, 0.0
        %v1318 = vmax.f32 %v1301, 0.0
        %v1319 = vmax.f32 %v1305, 0.0
        %v1320 = vmax.f32 %v1307, 0.0
        %v1321 = vmax.f32 %v1311, 0.0
        %v1322 = vmax.f32 %v1313, 0.0
        %1327 = vrot.lane.b32.xlu0 %v1315, 112
        %v1328 = vpop.permute.xlu0 %1327
        %1329 = vrot.lane.b32.xlu0 %v1317, 112
        %v1330 = vpop.permute.xlu0 %1329
        %1331 = vrot.lane.b32.xlu0 %v1319, 112
        %v1332 = vpop.permute.xlu0 %1331
        %1333 = vrot.lane.b32.xlu0 %v1321, 112
        %v1334 = vpop.permute.xlu0 %1333
        %1343 = vrot.lane.b32.xlu0 %v1315, 16
        %v1344 = vpop.permute.xlu0 %1343
        %1345 = vrot.lane.b32.xlu0 %v1316, 16
        %v1346 = vpop.permute.xlu0 %1345
        %1347 = vrot.lane.b32.xlu0 %v1317, 16
        %v1348 = vpop.permute.xlu0 %1347
        %1349 = vrot.lane.b32.xlu0 %v1318, 16
        %v1350 = vpop.permute.xlu0 %1349
        %1351 = vrot.lane.b32.xlu0 %v1319, 16
        %v1352 = vpop.permute.xlu0 %1351
        %1353 = vrot.lane.b32.xlu0 %v1320, 16
        %v1354 = vpop.permute.xlu0 %1353
        %1355 = vrot.lane.b32.xlu0 %v1321, 16
        %v1356 = vpop.permute.xlu0 %1355
        %1357 = vrot.lane.b32.xlu0 %v1322, 16
        %v1358 = vpop.permute.xlu0 %1357
        %v1359 = vsel %vm448, %v1344, %v1346
        %v1360 = vsel %vm448, %v1348, %v1350
        %v1361 = vsel %vm448, %v1352, %v1354
        %v1362 = vsel %vm448, %v1356, %v1358
        %v1371 = vsel %vm448, %v1328, %v1344
        %v1372 = vsel %vm448, %v1330, %v1348
        %v1373 = vsel %vm448, %v1332, %v1352
        %v1374 = vsel %vm448, %v1334, %v1356
        %1375 = vrot.lane.b32.xlu0 %v1316, 112
        %v1376 = vpop.permute.xlu0 %1375
        %1377 = vrot.lane.b32.xlu0 %v1318, 112
        %v1378 = vpop.permute.xlu0 %1377
        %1379 = vrot.lane.b32.xlu0 %v1320, 112
        %v1380 = vpop.permute.xlu0 %1379
        %1381 = vrot.lane.b32.xlu0 %v1322, 112
        %v1382 = vpop.permute.xlu0 %1381
        %v1383 = vsel %vm473, %v1328, %v1376
        %v1384 = vsel %vm473, %v1330, %v1378
        %v1385 = vsel %vm473, %v1332, %v1380
        %v1386 = vsel %vm473, %v1334, %v1382
        %v1399 = vsel %vm473, %v1376, %v1346
        %v1400 = vsel %vm473, %v1378, %v1350
        %v1401 = vsel %vm473, %v1380, %v1354
        %v1402 = vsel %vm473, %v1382, %v1358
        %1407 = vrot.lane.b32.xlu0 %v1371, 127
        %v1408 = vpop.permute.xlu0 %1407
        %1409 = vrot.lane.b32.xlu0 %v1359, 127
        %v1410 = vpop.permute.xlu0 %1409
        %1411 = vrot.lane.b32.xlu0 %v1372, 127
        %v1412 = vpop.permute.xlu0 %1411
        %1413 = vrot.lane.b32.xlu0 %v1360, 127
        %v1414 = vpop.permute.xlu0 %1413
        %1415 = vrot.lane.b32.xlu0 %v1373, 127
        %v1416 = vpop.permute.xlu0 %1415
        %1417 = vrot.lane.b32.xlu0 %v1361, 127
        %v1418 = vpop.permute.xlu0 %1417
        %1419 = vrot.lane.b32.xlu0 %v1374, 127
        %v1420 = vpop.permute.xlu0 %1419
        %1421 = vrot.lane.b32.xlu0 %v1362, 127
        %v1422 = vpop.permute.xlu0 %1421
        %v1423 = vsel %vm514, %v1408, %v1410
        %v1424 = vsel %vm514, %v1412, %v1414
        %v1425 = vsel %vm514, %v1416, %v1418
        %v1426 = vsel %vm514, %v1420, %v1422
        %v1439 = vsel %vm514, %v1410, %v1408
        %v1440 = vsel %vm514, %v1414, %v1412
        %v1441 = vsel %vm514, %v1418, %v1416
        %v1442 = vsel %vm514, %v1422, %v1420
        %1443 = vrot.lane.b32.xlu0 %v1359, 1
        %v1444 = vpop.permute.xlu0 %1443
        %1445 = vrot.lane.b32.xlu0 %v1360, 1
        %v1446 = vpop.permute.xlu0 %1445
        %1447 = vrot.lane.b32.xlu0 %v1361, 1
        %v1448 = vpop.permute.xlu0 %1447
        %1449 = vrot.lane.b32.xlu0 %v1362, 1
        %v1450 = vpop.permute.xlu0 %1449
        %1455 = vrot.lane.b32.xlu0 %v1371, 1
        %v1456 = vpop.permute.xlu0 %1455
        %1457 = vrot.lane.b32.xlu0 %v1372, 1
        %v1458 = vpop.permute.xlu0 %1457
        %1459 = vrot.lane.b32.xlu0 %v1373, 1
        %v1460 = vpop.permute.xlu0 %1459
        %1461 = vrot.lane.b32.xlu0 %v1374, 1
        %v1462 = vpop.permute.xlu0 %1461
        %v1463 = vsel %vm555, %v1456, %v1444
        %v1464 = vsel %vm555, %v1458, %v1446
        %v1465 = vsel %vm555, %v1460, %v1448
        %v1466 = vsel %vm555, %v1462, %v1450
        %v1475 = vsel %vm555, %v1444, %v1456
        %v1476 = vsel %vm555, %v1446, %v1458
        %v1477 = vsel %vm555, %v1448, %v1460
        %v1478 = vsel %vm555, %v1450, %v1462
        %v1479 = vsel %vm403, %v1423, %v1475
        %v1480 = vsel %vm404, %v1439, %v1463
        %v1481 = vsel %vm403, %v1424, %v1476
        %v1482 = vsel %vm404, %v1440, %v1464
        %v1483 = vsel %vm403, %v1425, %v1477
        %v1484 = vsel %vm404, %v1441, %v1465
        %v1485 = vsel %vm403, %v1426, %v1478
        %v1486 = vsel %vm404, %v1442, %v1466
        %v1487 = vsel %vm405, %v1475, %v1423
        %v1488 = vsel %vm406, %v1463, %v1439
        %v1489 = vsel %vm405, %v1476, %v1424
        %v1490 = vsel %vm406, %v1464, %v1440
        %v1491 = vsel %vm405, %v1477, %v1425
        %v1492 = vsel %vm406, %v1465, %v1441
        %v1493 = vsel %vm405, %v1478, %v1426
        %v1494 = vsel %vm406, %v1466, %v1442
        %1495 = vrot.lane.b32.xlu0 %v1315, 127
        %v1496 = vpop.permute.xlu0 %1495
        %1497 = vrot.lane.b32.xlu0 %v1316, 127
        %v1498 = vpop.permute.xlu0 %1497
        %1499 = vrot.lane.b32.xlu0 %v1317, 127
        %v1500 = vpop.permute.xlu0 %1499
        %1501 = vrot.lane.b32.xlu0 %v1318, 127
        %v1502 = vpop.permute.xlu0 %1501
        %1503 = vrot.lane.b32.xlu0 %v1319, 127
        %v1504 = vpop.permute.xlu0 %1503
        %1505 = vrot.lane.b32.xlu0 %v1320, 127
        %v1506 = vpop.permute.xlu0 %1505
        %1507 = vrot.lane.b32.xlu0 %v1321, 127
        %v1508 = vpop.permute.xlu0 %1507
        %1509 = vrot.lane.b32.xlu0 %v1322, 127
        %v1510 = vpop.permute.xlu0 %1509
        %v1511 = vsel %vm514, %v1496, %v1498
        %v1512 = vsel %vm514, %v1500, %v1502
        %v1513 = vsel %vm514, %v1504, %v1506
        %v1514 = vsel %vm514, %v1508, %v1510
        %v1527 = vsel %vm514, %v1498, %v1496
        %v1528 = vsel %vm514, %v1502, %v1500
        %v1529 = vsel %vm514, %v1506, %v1504
        %v1530 = vsel %vm514, %v1510, %v1508
        %1531 = vrot.lane.b32.xlu0 %v1316, 1
        %v1532 = vpop.permute.xlu0 %1531
        %1533 = vrot.lane.b32.xlu0 %v1318, 1
        %v1534 = vpop.permute.xlu0 %1533
        %1535 = vrot.lane.b32.xlu0 %v1320, 1
        %v1536 = vpop.permute.xlu0 %1535
        %1537 = vrot.lane.b32.xlu0 %v1322, 1
        %v1538 = vpop.permute.xlu0 %1537
        %1543 = vrot.lane.b32.xlu0 %v1315, 1
        %v1544 = vpop.permute.xlu0 %1543
        %1545 = vrot.lane.b32.xlu0 %v1317, 1
        %v1546 = vpop.permute.xlu0 %1545
        %1547 = vrot.lane.b32.xlu0 %v1319, 1
        %v1548 = vpop.permute.xlu0 %1547
        %1549 = vrot.lane.b32.xlu0 %v1321, 1
        %v1550 = vpop.permute.xlu0 %1549
        %v1551 = vsel %vm555, %v1544, %v1532
        %v1552 = vsel %vm555, %v1546, %v1534
        %v1553 = vsel %vm555, %v1548, %v1536
        %v1554 = vsel %vm555, %v1550, %v1538
        %v1563 = vsel %vm555, %v1532, %v1544
        %v1564 = vsel %vm555, %v1534, %v1546
        %v1565 = vsel %vm555, %v1536, %v1548
        %v1566 = vsel %vm555, %v1538, %v1550
        %v1567 = vsel %vm403, %v1511, %v1563
        %v1568 = vsel %vm404, %v1527, %v1551
        %v1569 = vsel %vm403, %v1512, %v1564
        %v1570 = vsel %vm404, %v1528, %v1552
        %v1571 = vsel %vm403, %v1513, %v1565
        %v1572 = vsel %vm404, %v1529, %v1553
        %v1573 = vsel %vm403, %v1514, %v1566
        %v1574 = vsel %vm404, %v1530, %v1554
        %v1575 = vsel %vm405, %v1563, %v1511
        %v1576 = vsel %vm406, %v1551, %v1527
        %v1577 = vsel %vm405, %v1564, %v1512
        %v1578 = vsel %vm406, %v1552, %v1528
        %v1579 = vsel %vm405, %v1565, %v1513
        %v1580 = vsel %vm406, %v1553, %v1529
        %v1581 = vsel %vm405, %v1566, %v1514
        %v1582 = vsel %vm406, %v1554, %v1530
        %1587 = vrot.lane.b32.xlu0 %v1383, 127
        %v1588 = vpop.permute.xlu0 %1587
        %1589 = vrot.lane.b32.xlu0 %v1399, 127
        %v1590 = vpop.permute.xlu0 %1589
        %1591 = vrot.lane.b32.xlu0 %v1384, 127
        %v1592 = vpop.permute.xlu0 %1591
        %1593 = vrot.lane.b32.xlu0 %v1400, 127
        %v1594 = vpop.permute.xlu0 %1593
        %1595 = vrot.lane.b32.xlu0 %v1385, 127
        %v1596 = vpop.permute.xlu0 %1595
        %1597 = vrot.lane.b32.xlu0 %v1401, 127
        %v1598 = vpop.permute.xlu0 %1597
        %1599 = vrot.lane.b32.xlu0 %v1386, 127
        %v1600 = vpop.permute.xlu0 %1599
        %1601 = vrot.lane.b32.xlu0 %v1402, 127
        %v1602 = vpop.permute.xlu0 %1601
        %v1603 = vsel %vm514, %v1588, %v1590
        %v1604 = vsel %vm514, %v1592, %v1594
        %v1605 = vsel %vm514, %v1596, %v1598
        %v1606 = vsel %vm514, %v1600, %v1602
        %v1619 = vsel %vm514, %v1590, %v1588
        %v1620 = vsel %vm514, %v1594, %v1592
        %v1621 = vsel %vm514, %v1598, %v1596
        %v1622 = vsel %vm514, %v1602, %v1600
        %1623 = vrot.lane.b32.xlu0 %v1399, 1
        %v1624 = vpop.permute.xlu0 %1623
        %1625 = vrot.lane.b32.xlu0 %v1400, 1
        %v1626 = vpop.permute.xlu0 %1625
        %1627 = vrot.lane.b32.xlu0 %v1401, 1
        %v1628 = vpop.permute.xlu0 %1627
        %1629 = vrot.lane.b32.xlu0 %v1402, 1
        %v1630 = vpop.permute.xlu0 %1629
        %1635 = vrot.lane.b32.xlu0 %v1383, 1
        %v1636 = vpop.permute.xlu0 %1635
        %1637 = vrot.lane.b32.xlu0 %v1384, 1
        %v1638 = vpop.permute.xlu0 %1637
        %1639 = vrot.lane.b32.xlu0 %v1385, 1
        %v1640 = vpop.permute.xlu0 %1639
        %1641 = vrot.lane.b32.xlu0 %v1386, 1
        %v1642 = vpop.permute.xlu0 %1641
        %v1643 = vsel %vm555, %v1636, %v1624
        %v1644 = vsel %vm555, %v1638, %v1626
        %v1645 = vsel %vm555, %v1640, %v1628
        %v1646 = vsel %vm555, %v1642, %v1630
        %v1655 = vsel %vm555, %v1624, %v1636
        %v1656 = vsel %vm555, %v1626, %v1638
        %v1657 = vsel %vm555, %v1628, %v1640
        %v1658 = vsel %vm555, %v1630, %v1642
        %v1659 = vsel %vm403, %v1603, %v1655
        %v1660 = vsel %vm404, %v1619, %v1643
        %v1661 = vsel %vm403, %v1604, %v1656
        %v1662 = vsel %vm404, %v1620, %v1644
        %v1663 = vsel %vm403, %v1605, %v1657
        %v1664 = vsel %vm404, %v1621, %v1645
        %v1665 = vsel %vm403, %v1606, %v1658
        %v1666 = vsel %vm404, %v1622, %v1646
        %v1667 = vsel %vm405, %v1655, %v1603
        %v1668 = vsel %vm406, %v1643, %v1619
        %v1669 = vsel %vm405, %v1656, %v1604
        %v1670 = vsel %vm406, %v1644, %v1620
        %v1671 = vsel %vm405, %v1657, %v1605
        %v1672 = vsel %vm406, %v1645, %v1621
        %v1673 = vsel %vm405, %v1658, %v1606
        %v1674 = vsel %vm406, %v1646, %v1622
        %v1675 = vld [vmem:[#allocation2] sm:$0xff]
        %v1676 = vld [vmem:[#allocation2 + $0x8] sm:$0xff]
        %v1677 = vld [vmem:[#allocation2 + $0x10] sm:$0xff]
        %v1678 = vld [vmem:[#allocation2 + $0x18] sm:$0xff]
        %v1679 = vld [vmem:[#allocation2 + $0x20] sm:$0xff]
        %v1680 = vld [vmem:[#allocation2 + $0x28] sm:$0xff]
        %v1681 = vld [vmem:[#allocation2 + $0x30] sm:$0xff]
        %v1682 = vld [vmem:[#allocation2 + $0x38] sm:$0xff]
        %v1683 = vld [vmem:[#allocation2 + $0x40] sm:$0xff]
        %v1684 = vld [vmem:[#allocation2 + $0x48] sm:$0xff]
        %v1685 = vld [vmem:[#allocation2 + $0x50] sm:$0xff]
        %v1686 = vld [vmem:[#allocation2 + $0x58] sm:$0xff]
        %v1688 = vsel %vm780, %v1677, 0
        %v1691 = vsel %vm780, %v1680, 0
        %v1694 = vsel %vm780, %v1683, 0
        %v1697 = vsel %vm780, %v1686, 0
        %1699 = vmatprep.subr.mxu0 %v1480
        %1700 = vmatpush1.msra.mxu0 %v1479
        %1701 = vmatprep.subr.mxu0 %v1482
        %1702 = vmatpush1.msra.mxu0 %v1481
        %1703 = vmatprep.subr.mxu0 %v1484
        %1704 = vmatpush1.msra.mxu0 %v1483
        %1705 = vmatprep.subr.mxu0 %v1486
        %1706 = vmatpush1.msra.mxu0 %v1485
        %1707 = vmatprep.subr.mxu0 %v1359
        %1708 = vmatpush1.msra.mxu0 %v1371
        %1709 = vmatprep.subr.mxu0 %v1360
        %1710 = vmatpush1.msra.mxu0 %v1372
        %1711 = vmatprep.subr.mxu0 %v1361
        %1712 = vmatpush1.msra.mxu0 %v1373
        %1713 = vmatprep.subr.mxu0 %v1362
        %1714 = vmatpush1.msra.mxu0 %v1374
        %1715 = vmatprep.subr.mxu0 %v1488
        %1716 = vmatpush1.msra.mxu0 %v1487
        %1717 = vmatprep.subr.mxu0 %v1490
        %1718 = vmatpush1.msra.mxu0 %v1489
        %1719 = vmatprep.subr.mxu0 %v1492
        %1720 = vmatpush1.msra.mxu0 %v1491
        %1721 = vmatprep.subr.mxu0 %v1494
        %1722 = vmatpush1.msra.mxu0 %v1493
        %1723 = vmatprep.subr.mxu0 %v1568
        %1724 = vmatpush1.msra.mxu0 %v1567
        %1725 = vmatprep.subr.mxu0 %v1570
        %1726 = vmatpush1.msra.mxu0 %v1569
        %1727 = vmatprep.subr.mxu0 %v1572
        %1728 = vmatpush1.msra.mxu0 %v1571
        %1729 = vmatprep.subr.mxu0 %v1574
        %1730 = vmatpush1.msra.mxu0 %v1573
        %1731 = vmatprep.subr.mxu0 %v1316
        %1732 = vmatpush1.msra.mxu0 %v1315
        %1733 = vmatprep.subr.mxu0 %v1318
        %1734 = vmatpush1.msra.mxu0 %v1317
        %1735 = vmatprep.subr.mxu0 %v1320
        %1736 = vmatpush1.msra.mxu0 %v1319
        %1737 = vmatprep.subr.mxu0 %v1322
        %1738 = vmatpush1.msra.mxu0 %v1321
        %1739 = vmatprep.subr.mxu0 %v1576
        %1740 = vmatpush1.msra.mxu0 %v1575
        %1741 = vmatprep.subr.mxu0 %v1578
        %1742 = vmatpush1.msra.mxu0 %v1577
        %1743 = vmatprep.subr.mxu0 %v1580
        %1744 = vmatpush1.msra.mxu0 %v1579
        %1745 = vmatprep.subr.mxu0 %v1582
        %1746 = vmatpush1.msra.mxu0 %v1581
        %1747 = vmatprep.subr.mxu0 %v1660
        %1748 = vmatpush1.msra.mxu0 %v1659
        %1749 = vmatprep.subr.mxu0 %v1662
        %1750 = vmatpush1.msra.mxu0 %v1661
        %1751 = vmatprep.subr.mxu0 %v1664
        %1752 = vmatpush1.msra.mxu0 %v1663
        %1753 = vmatprep.subr.mxu0 %v1666
        %1754 = vmatpush1.msra.mxu0 %v1665
        %1755 = vmatprep.subr.mxu0 %v1399
        %1756 = vmatpush1.msra.mxu0 %v1383
        %1757 = vmatprep.subr.mxu0 %v1400
        %1758 = vmatpush1.msra.mxu0 %v1384
        %1759 = vmatprep.subr.mxu0 %v1401
        %1760 = vmatpush1.msra.mxu0 %v1385
        %1761 = vmatprep.subr.mxu0 %v1402
        %1762 = vmatpush1.msra.mxu0 %v1386
        %1763 = vmatprep.mubr.f32.mxu0 %v1676
        %1764 = vmatmul.mubr.f32.gmra.mrb[0].mxu0 %v1675
        %v1765 = vpop.f32.mrb[0].mxu0
        %v1766 = vadd.f32 0.0, %v1765
        %v1767 = vpop.f32.mrb[0].mxu0
        %v1768 = vadd.f32 0.0, %v1767
        %1769 = vmatprep.mubr.f32.mxu0 %v1679
        %1770 = vmatmul.mubr.f32.gmra.mrb[0].mxu0 %v1678
        %v1771 = vpop.f32.mrb[0].mxu0
        %v1772 = vadd.f32 0.0, %v1771
        %v1773 = vpop.f32.mrb[0].mxu0
        %v1774 = vadd.f32 0.0, %v1773
        %1775 = vmatprep.mubr.f32.mxu0 %v1682
        %1776 = vmatmul.mubr.f32.gmra.mrb[0].mxu0 %v1681
        %v1777 = vpop.f32.mrb[0].mxu0
        %v1778 = vadd.f32 0.0, %v1777
        %v1779 = vpop.f32.mrb[0].mxu0
        %v1780 = vadd.f32 0.0, %v1779
        %1781 = vmatprep.mubr.f32.mxu0 %v1685
        %1782 = vmatmul.mubr.f32.gmra.mrb[0].mxu0 %v1684
        %v1783 = vpop.f32.mrb[0].mxu0
        %v1784 = vadd.f32 0.0, %v1783
        %v1785 = vpop.f32.mrb[0].mxu0
        %v1786 = vadd.f32 0.0, %v1785
        %1787 = vdwg.mxu0
        %1788 = vmatprep.subr.mxu0 %v1668
        %1789 = vmatpush1.msra.mxu0 %v1667
        %1790 = vmatprep.subr.mxu0 %v1670
        %1791 = vmatpush1.msra.mxu0 %v1669
        %1792 = vmatprep.subr.mxu0 %v1672
        %1793 = vmatpush1.msra.mxu0 %v1671
        %1794 = vmatprep.subr.mxu0 %v1674
        %1795 = vmatpush1.msra.mxu0 %v1673
        %1796 = vmatprep.subr.mxu0 0.0
        %1797 = vmatpush1.msra.mxu0 0.0
        %1798 = vmatprep.subr.mxu0 0.0
        %1799 = vmatpush1.msra.mxu0 0.0
        %1800 = vmatprep.subr.mxu0 0.0
        %1801 = vmatpush1.msra.mxu0 0.0
        %1802 = vmatprep.subr.mxu0 0.0
        %1803 = vmatpush1.msra.mxu0 0.0
        %1804 = vmatprep.subr.mxu0 0.0
        %1805 = vmatpush1.msra.mxu0 0.0
        %1806 = vmatprep.subr.mxu0 0.0
        %1807 = vmatpush1.msra.mxu0 0.0
        %1808 = vmatprep.subr.mxu0 0.0
        %1809 = vmatpush1.msra.mxu0 0.0
        %1810 = vmatprep.subr.mxu0 0.0
        %1811 = vmatpush1.msra.mxu0 0.0
        %1812 = vmatprep.subr.mxu0 0.0
        %1813 = vmatpush1.msra.mxu0 0.0
        %1814 = vmatprep.subr.mxu0 0.0
        %1815 = vmatpush1.msra.mxu0 0.0
        %1816 = vmatprep.subr.mxu0 0.0
        %1817 = vmatpush1.msra.mxu0 0.0
        %1818 = vmatprep.subr.mxu0 0.0
        %1819 = vmatpush1.msra.mxu0 0.0
        %1820 = vmatprep.subr.mxu0 0.0
        %1821 = vmatpush1.msra.mxu0 0.0
        %1822 = vmatprep.subr.mxu0 0.0
        %1823 = vmatpush1.msra.mxu0 0.0
        %1824 = vmatprep.subr.mxu0 0.0
        %1825 = vmatpush1.msra.mxu0 0.0
        %1826 = vmatprep.subr.mxu0 0.0
        %1827 = vmatpush1.msra.mxu0 0.0
        %1828 = vmatprep.subr.mxu0 0.0
        %1829 = vmatpush1.msra.mxu0 0.0
        %1830 = vmatprep.subr.mxu0 0.0
        %1831 = vmatpush1.msra.mxu0 0.0
        %1832 = vmatprep.subr.mxu0 0.0
        %1833 = vmatpush1.msra.mxu0 0.0
        %1834 = vmatprep.subr.mxu0 0.0
        %1835 = vmatpush1.msra.mxu0 0.0
        %1836 = vmatprep.subr.mxu0 0.0
        %1837 = vmatpush1.msra.mxu0 0.0
        %1838 = vmatprep.subr.mxu0 0.0
        %1839 = vmatpush1.msra.mxu0 0.0
        %1840 = vmatprep.subr.mxu0 0.0
        %1841 = vmatpush1.msra.mxu0 0.0
        %1842 = vmatprep.subr.mxu0 0.0
        %1843 = vmatpush1.msra.mxu0 0.0
        %1844 = vmatprep.subr.mxu0 0.0
        %1845 = vmatpush1.msra.mxu0 0.0
        %1846 = vmatprep.subr.mxu0 0.0
        %1847 = vmatpush1.msra.mxu0 0.0
        %1848 = vmatprep.subr.mxu0 0.0
        %1849 = vmatpush1.msra.mxu0 0.0
        %1850 = vmatprep.subr.mxu0 0.0
        %1851 = vmatpush1.msra.mxu0 0.0
        %1852 = vmatprep.mubr.f32.mxu0 0.0
        %1853 = vmatmul.mubr.f32.gmra.mrb[0].mxu0 %v1688
        %v1854 = vpop.f32.mrb[0].mxu0
        %v1855 = vadd.f32 %v1766, %v1854
        %v1856 = vpop.f32.mrb[0].mxu0
        %v1857 = vadd.f32 %v1768, %v1856
        %1858 = vmatprep.mubr.f32.mxu0 0.0
        %1859 = vmatmul.mubr.f32.gmra.mrb[0].mxu0 %v1691
        %v1860 = vpop.f32.mrb[0].mxu0
        %v1861 = vadd.f32 %v1772, %v1860
        %v1862 = vpop.f32.mrb[0].mxu0
        %v1863 = vadd.f32 %v1774, %v1862
        %1864 = vmatprep.mubr.f32.mxu0 0.0
        %1865 = vmatmul.mubr.f32.gmra.mrb[0].mxu0 %v1694
        %v1866 = vpop.f32.mrb[0].mxu0
        %v1867 = vadd.f32 %v1778, %v1866
        %v1868 = vpop.f32.mrb[0].mxu0
        %v1869 = vadd.f32 %v1780, %v1868
        %1870 = vmatprep.mubr.f32.mxu0 0.0
        %1871 = vmatmul.mubr.f32.gmra.mrb[0].mxu0 %v1697
        %v1872 = vpop.f32.mrb[0].mxu0
        %v1873 = vadd.f32 %v1784, %v1872
        %v1874 = vpop.f32.mrb[0].mxu0
        %v1875 = vadd.f32 %v1786, %v1874
        %1876 = vdwg.mxu0
        %v1877 = vadd.f32 %v1855, %v1857
        %1878 = vadd.xlane.f32.xlu0 %v1877
        %v1879 = vpop.xlane.xlu0 %1878
        %v1880 = vadd.f32 %v1861, %v1863
        %1881 = vadd.xlane.f32.xlu0 %v1880
        %v1882 = vpop.xlane.xlu0 %1881
        %v1883 = vadd.f32 %v1867, %v1869
        %1884 = vadd.xlane.f32.xlu0 %v1883
        %v1885 = vpop.xlane.xlu0 %1884
        %v1886 = vadd.f32 %v1873, %v1875
        %1887 = vadd.xlane.f32.xlu0 %v1886
        %v1888 = vpop.xlane.xlu0 %1887
        %v1889 = vmul.f32 %v1855, %v1855
        %v1890 = vmul.f32 %v1857, %v1857
        %v1891 = vmul.f32 %v1861, %v1861
        %v1892 = vmul.f32 %v1863, %v1863
        %v1893 = vmul.f32 %v1867, %v1867
        %v1894 = vmul.f32 %v1869, %v1869
        %v1895 = vmul.f32 %v1873, %v1873
        %v1896 = vmul.f32 %v1875, %v1875
        %v1897 = vadd.f32 %v1889, %v1890
        %1898 = vadd.xlane.f32.xlu0 %v1897
        %v1899 = vpop.xlane.xlu0 %1898
        %v1900 = vadd.f32 %v1891, %v1892
        %1901 = vadd.xlane.f32.xlu0 %v1900
        %v1902 = vpop.xlane.xlu0 %1901
        %v1903 = vadd.f32 %v1893, %v1894
        %1904 = vadd.xlane.f32.xlu0 %v1903
        %v1905 = vpop.xlane.xlu0 %1904
        %v1906 = vadd.f32 %v1895, %v1896
        %1907 = vadd.xlane.f32.xlu0 %v1906
        %v1908 = vpop.xlane.xlu0 %1907
        %v1909 = vmul.f32 %v1879, 0.00390625
        %v1910 = vmul.f32 %v1882, 0.00390625
        %v1911 = vmul.f32 %v1885, 0.00390625
        %v1912 = vmul.f32 %v1888, 0.00390625
        %v1913 = vmul.f32 %v1899, 0.00390625
        %v1914 = vmul.f32 %v1902, 0.00390625
        %v1915 = vmul.f32 %v1905, 0.00390625
        %v1916 = vmul.f32 %v1908, 0.00390625
        %v1917 = vmul.f32 %v1909, %v1909
        %v1918 = vmul.f32 %v1910, %v1910
        %v1919 = vmul.f32 %v1911, %v1911
        %v1920 = vmul.f32 %v1912, %v1912
        %v1921 = vsub.f32 %v1913, %v1917
        %v1922 = vsub.f32 %v1914, %v1918
        %v1923 = vsub.f32 %v1915, %v1919
        %v1924 = vsub.f32 %v1916, %v1920
        %v1925 = vsub.f32 %v1855, %v1909
        %v1926 = vsub.f32 %v1857, %v1909
        %v1927 = vsub.f32 %v1861, %v1910
        %v1928 = vsub.f32 %v1863, %v1910
        %v1929 = vsub.f32 %v1867, %v1911
        %v1930 = vsub.f32 %v1869, %v1911
        %v1931 = vsub.f32 %v1873, %v1912
        %v1932 = vsub.f32 %v1875, %v1912
        %v1933 = vadd.f32 %v1921, 1e-05
        %v1934 = vadd.f32 %v1922, 1e-05
        %v1935 = vadd.f32 %v1923, 1e-05
        %v1936 = vadd.f32 %v1924, 1e-05
        %v1937 = vrsqrt.pop %v1933
        %v1938 = vrsqrt.pop %v1934
        %v1939 = vrsqrt.pop %v1935
        %v1940 = vrsqrt.pop %v1936
        %v1941 = vmul.f32 %v1925, %v1937
        %v1942 = vmul.f32 %v1926, %v1937
        %v1943 = vmul.f32 %v1927, %v1938
        %v1944 = vmul.f32 %v1928, %v1938
        %v1945 = vmul.f32 %v1929, %v1939
        %v1946 = vmul.f32 %v1930, %v1939
        %v1947 = vmul.f32 %v1931, %v1940
        %v1948 = vmul.f32 %v1932, %v1940
        %v1949 = vld [vmem:[%s5] sm:$0xff]
        %v1950 = vld [vmem:[%s5 + $0x8] sm:$0xff]
        %v1951 = vld [vmem:[%s5 + $0x10] sm:$0xff]
        %v1952 = vld [vmem:[%s5 + $0x18] sm:$0xff]
        %v1953 = vld [vmem:[%s5 + $0x20] sm:$0xff]
        %1954 = vset.pattern.permute.xlu0 1
        %1955 = vperm.xlu0 %1954, %v407
        %v1956 = vpop.permute.xlu0 %1955
        %1958 = vset.pattern.permute.xlu0 1
        %1959 = vperm.xlu0 %1958, %v408
        %v1960 = vpop.permute.xlu0 %1959
        %1962 = vset.pattern.permute.xlu0 1
        %1963 = vperm.xlu0 %1962, %v409
        %v1964 = vpop.permute.xlu0 %1963
        %1966 = vset.pattern.permute.xlu0 1
        %1967 = vperm.xlu0 %1966, %v410
        %v1968 = vpop.permute.xlu0 %1967
        %1970 = vset.pattern.permute.xlu0 1
        %1971 = vperm.xlu0 %1970, %v411
        %v1972 = vpop.permute.xlu0 %1971
        %v1975 = vsel %vm780, %v1949, 0
        %v1978 = vsel %vm780, %v1950, 0
        %v1981 = vsel %vm780, %v1951, 0
        %v1984 = vsel %vm780, %v1952, 0
        %v1987 = vsel %vm780, %v1953, 0
        %1989 = vmatprep.subr.mxu0 %v1942
        %1990 = vmatpush1.msra.mxu0 %v1941
        %1991 = vmatprep.subr.mxu0 %v1944
        %1992 = vmatpush1.msra.mxu0 %v1943
        %1993 = vmatprep.subr.mxu0 %v1946
        %1994 = vmatpush1.msra.mxu0 %v1945
        %1995 = vmatprep.subr.mxu0 %v1948
        %1996 = vmatpush1.msra.mxu0 %v1947
        %1997 = vmatprep.subr.mxu0 0.0
        %1998 = vmatpush1.msra.mxu0 0.0
        %1999 = vmatprep.subr.mxu0 0.0
        %2000 = vmatpush1.msra.mxu0 0.0
        %2001 = vmatprep.subr.mxu0 0.0
        %2002 = vmatpush1.msra.mxu0 0.0
        %2003 = vmatprep.subr.mxu0 0.0
        %2004 = vmatpush1.msra.mxu0 0.0
        %2005 = vmatprep.subr.mxu0 0.0
        %2006 = vmatpush1.msra.mxu0 0.0
        %2007 = vmatprep.subr.mxu0 0.0
        %2008 = vmatpush1.msra.mxu0 0.0
        %2009 = vmatprep.subr.mxu0 0.0
        %2010 = vmatpush1.msra.mxu0 0.0
        %2011 = vmatprep.subr.mxu0 0.0
        %2012 = vmatpush1.msra.mxu0 0.0
        %2013 = vmatprep.subr.mxu0 0.0
        %2014 = vmatpush1.msra.mxu0 0.0
        %2015 = vmatprep.subr.mxu0 0.0
        %2016 = vmatpush1.msra.mxu0 0.0
        %2017 = vmatprep.subr.mxu0 0.0
        %2018 = vmatpush1.msra.mxu0 0.0
        %2019 = vmatprep.subr.mxu0 0.0
        %2020 = vmatpush1.msra.mxu0 0.0
        %2021 = vmatprep.subr.mxu0 0.0
        %2022 = vmatpush1.msra.mxu0 0.0
        %2023 = vmatprep.subr.mxu0 0.0
        %2024 = vmatpush1.msra.mxu0 0.0
        %2025 = vmatprep.subr.mxu0 0.0
        %2026 = vmatpush1.msra.mxu0 0.0
        %2027 = vmatprep.subr.mxu0 0.0
        %2028 = vmatpush1.msra.mxu0 0.0
        %2029 = vmatprep.subr.mxu0 0.0
        %2030 = vmatpush1.msra.mxu0 0.0
        %2031 = vmatprep.subr.mxu0 0.0
        %2032 = vmatpush1.msra.mxu0 0.0
        %2033 = vmatprep.subr.mxu0 0.0
        %2034 = vmatpush1.msra.mxu0 0.0
        %2035 = vmatprep.subr.mxu0 0.0
        %2036 = vmatpush1.msra.mxu0 0.0
        %2037 = vmatprep.subr.mxu0 0.0
        %2038 = vmatpush1.msra.mxu0 0.0
        %2039 = vmatprep.subr.mxu0 0.0
        %2040 = vmatpush1.msra.mxu0 0.0
        %2041 = vmatprep.subr.mxu0 0.0
        %2042 = vmatpush1.msra.mxu0 0.0
        %2043 = vmatprep.subr.mxu0 0.0
        %2044 = vmatpush1.msra.mxu0 0.0
        %2045 = vmatprep.subr.mxu0 0.0
        %2046 = vmatpush1.msra.mxu0 0.0
        %2047 = vmatprep.subr.mxu0 0.0
        %2048 = vmatpush1.msra.mxu0 0.0
        %2049 = vmatprep.subr.mxu0 0.0
        %2050 = vmatpush1.msra.mxu0 0.0
        %2051 = vmatprep.subr.mxu0 0.0
        %2052 = vmatpush1.msra.mxu0 0.0
        %2053 = vmatprep.mubr.f32.mxu0 0.0
        %2054 = vmatmul.mubr.f32.gmra.mrb[0].mxu0 %v1975
        %v2055 = vpop.f32.mrb[0].mxu0
        %v2056 = vadd.f32 %v1956, %v2055
        %v2057 = vpop.f32.mrb[0].mxu0
        %v2058 = vadd.f32 %v1956, %v2057
        %2059 = vmatprep.mubr.f32.mxu0 0.0
        %2060 = vmatmul.mubr.f32.gmra.mrb[0].mxu0 %v1978
        %v2061 = vpop.f32.mrb[0].mxu0
        %v2062 = vadd.f32 %v1960, %v2061
        %v2063 = vpop.f32.mrb[0].mxu0
        %v2064 = vadd.f32 %v1960, %v2063
        %2065 = vmatprep.mubr.f32.mxu0 0.0
        %2066 = vmatmul.mubr.f32.gmra.mrb[0].mxu0 %v1981
        %v2067 = vpop.f32.mrb[0].mxu0
        %v2068 = vadd.f32 %v1964, %v2067
        %v2069 = vpop.f32.mrb[0].mxu0
        %v2070 = vadd.f32 %v1964, %v2069
        %2071 = vmatprep.mubr.f32.mxu0 0.0
        %2072 = vmatmul.mubr.f32.gmra.mrb[0].mxu0 %v1984
        %v2073 = vpop.f32.mrb[0].mxu0
        %v2074 = vadd.f32 %v1968, %v2073
        %v2075 = vpop.f32.mrb[0].mxu0
        %v2076 = vadd.f32 %v1968, %v2075
        %2077 = vmatprep.mubr.f32.mxu0 0.0
        %2078 = vmatmul.mubr.f32.gmra.mrb[0].mxu0 %v1987
        %v2079 = vpop.f32.mrb[0].mxu0
        %v2080 = vadd.f32 %v1972, %v2079
        %v2081 = vpop.f32.mrb[0].mxu0
        %v2082 = vadd.f32 %v1972, %v2081
        %2083 = vdwg.mxu0
        %v2084 = vmax.f32 %v2056, 0.0
        %v2085 = vmax.f32 %v2058, 0.0
        %v2086 = vmax.f32 %v2062, 0.0
        %v2087 = vmax.f32 %v2064, 0.0
        %v2088 = vmax.f32 %v2068, 0.0
        %v2089 = vmax.f32 %v2070, 0.0
        %v2090 = vmax.f32 %v2074, 0.0
        %v2091 = vmax.f32 %v2076, 0.0
        %v2092 = vmax.f32 %v2080, 0.0
        %v2093 = vmax.f32 %v2082, 0.0
        %v2094 = vld [vmem:[#allocation7] sm:$0xff]
        %v2095 = vld [vmem:[#allocation7 + $0x8] sm:$0xff]
        %v2096 = vld [vmem:[#allocation7 + $0x10] sm:$0xff]
        %v2097 = vld [vmem:[#allocation7 + $0x18] sm:$0xff]
        %2098 = vset.pattern.permute.xlu0 3
        %2099 = vperm.xlu0 %2098, %v407
        %v2100 = vpop.permute.xlu0 %2099
        %2102 = vset.pattern.permute.xlu0 3
        %2103 = vperm.xlu0 %2102, %v408
        %v2104 = vpop.permute.xlu0 %2103
        %2106 = vset.pattern.permute.xlu0 3
        %2107 = vperm.xlu0 %2106, %v409
        %v2108 = vpop.permute.xlu0 %2107
        %2110 = vset.pattern.permute.xlu0 3
        %2111 = vperm.xlu0 %2110, %v410
        %v2112 = vpop.permute.xlu0 %2111
        %v2115 = vsel %vm1213, %v2094, 0
        %v2118 = vsel %vm1213, %v2095, 0
        %v2121 = vsel %vm1213, %v2096, 0
        %v2124 = vsel %vm1213, %v2097, 0
        %2126 = vmatprep.subr.mxu0 %v2085
        %2127 = vmatpush1.msra.mxu0 %v2084
        %2128 = vmatprep.subr.mxu0 %v2087
        %2129 = vmatpush1.msra.mxu0 %v2086
        %2130 = vmatprep.subr.mxu0 %v2089
        %2131 = vmatpush1.msra.mxu0 %v2088
        %2132 = vmatprep.subr.mxu0 %v2091
        %2133 = vmatpush1.msra.mxu0 %v2090
        %2134 = vmatprep.subr.mxu0 %v2093
        %2135 = vmatpush1.msra.mxu0 %v2092
        %2136 = vmatprep.subr.mxu0 0.0
        %2137 = vmatpush1.msra.mxu0 0.0
        %2138 = vmatprep.subr.mxu0 0.0
        %2139 = vmatpush1.msra.mxu0 0.0
        %2140 = vmatprep.subr.mxu0 0.0
        %2141 = vmatpush1.msra.mxu0 0.0
        %2142 = vmatprep.subr.mxu0 0.0
        %2143 = vmatpush1.msra.mxu0 0.0
        %2144 = vmatprep.subr.mxu0 0.0
        %2145 = vmatpush1.msra.mxu0 0.0
        %2146 = vmatprep.subr.mxu0 0.0
        %2147 = vmatpush1.msra.mxu0 0.0
        %2148 = vmatprep.subr.mxu0 0.0
        %2149 = vmatpush1.msra.mxu0 0.0
        %2150 = vmatprep.subr.mxu0 0.0
        %2151 = vmatpush1.msra.mxu0 0.0
        %2152 = vmatprep.subr.mxu0 0.0
        %2153 = vmatpush1.msra.mxu0 0.0
        %2154 = vmatprep.subr.mxu0 0.0
        %2155 = vmatpush1.msra.mxu0 0.0
        %2156 = vmatprep.subr.mxu0 0.0
        %2157 = vmatpush1.msra.mxu0 0.0
        %2158 = vmatprep.subr.mxu0 0.0
        %2159 = vmatpush1.msra.mxu0 0.0
        %2160 = vmatprep.subr.mxu0 0.0
        %2161 = vmatpush1.msra.mxu0 0.0
        %2162 = vmatprep.subr.mxu0 0.0
        %2163 = vmatpush1.msra.mxu0 0.0
        %2164 = vmatprep.subr.mxu0 0.0
        %2165 = vmatpush1.msra.mxu0 0.0
        %2166 = vmatprep.subr.mxu0 0.0
        %2167 = vmatpush1.msra.mxu0 0.0
        %2168 = vmatprep.subr.mxu0 0.0
        %2169 = vmatpush1.msra.mxu0 0.0
        %2170 = vmatprep.subr.mxu0 0.0
        %2171 = vmatpush1.msra.mxu0 0.0
        %2172 = vmatprep.subr.mxu0 0.0
        %2173 = vmatpush1.msra.mxu0 0.0
        %2174 = vmatprep.subr.mxu0 0.0
        %2175 = vmatpush1.msra.mxu0 0.0
        %2176 = vmatprep.subr.mxu0 0.0
        %2177 = vmatpush1.msra.mxu0 0.0
        %2178 = vmatprep.subr.mxu0 0.0
        %2179 = vmatpush1.msra.mxu0 0.0
        %2180 = vmatprep.subr.mxu0 0.0
        %2181 = vmatpush1.msra.mxu0 0.0
        %2182 = vmatprep.subr.mxu0 0.0
        %2183 = vmatpush1.msra.mxu0 0.0
        %2184 = vmatprep.subr.mxu0 0.0
        %2185 = vmatpush1.msra.mxu0 0.0
        %2186 = vmatprep.subr.mxu0 0.0
        %2187 = vmatpush1.msra.mxu0 0.0
        %2188 = vmatprep.subr.mxu0 0.0
        %2189 = vmatpush1.msra.mxu0 0.0
        %2190 = vmatprep.mubr.f32.mxu0 0.0
        %2191 = vmatmul.mubr.f32.gmra.mrb[0].mxu0 %v2115
        %v2192 = vpop.f32.mrb[0].mxu0
        %v2193 = vadd.f32 %v2100, %v2192
        %v2194 = vpop.f32.mrb[0].mxu0
        %v2195 = vadd.f32 %v2100, %v2194
        %2196 = vmatprep.mubr.f32.mxu0 0.0
        %2197 = vmatmul.mubr.f32.gmra.mrb[0].mxu0 %v2118
        %v2198 = vpop.f32.mrb[0].mxu0
        %v2199 = vadd.f32 %v2104, %v2198
        %v2200 = vpop.f32.mrb[0].mxu0
        %v2201 = vadd.f32 %v2104, %v2200
        %2202 = vmatprep.mubr.f32.mxu0 0.0
        %2203 = vmatmul.mubr.f32.gmra.mrb[0].mxu0 %v2121
        %v2204 = vpop.f32.mrb[0].mxu0
        %v2205 = vadd.f32 %v2108, %v2204
        %v2206 = vpop.f32.mrb[0].mxu0
        %v2207 = vadd.f32 %v2108, %v2206
        %2208 = vmatprep.mubr.f32.mxu0 0.0
        %2209 = vmatmul.mubr.f32.gmra.mrb[0].mxu0 %v2124
        %v2210 = vpop.f32.mrb[0].mxu0
        %v2211 = vadd.f32 %v2112, %v2210
        %v2212 = vpop.f32.mrb[0].mxu0
        %v2213 = vadd.f32 %v2112, %v2212
        %2214 = vdwg.mxu0
        %v2215 = vmax.f32 %v2193, 0.0
        %v2216 = vmax.f32 %v2195, 0.0
        %v2217 = vmax.f32 %v2199, 0.0
        %v2218 = vmax.f32 %v2201, 0.0
        %v2219 = vmax.f32 %v2205, 0.0
        %v2220 = vmax.f32 %v2207, 0.0
        %v2221 = vmax.f32 %v2211, 0.0
        %v2222 = vmax.f32 %v2213, 0.0
        %v2223 = vadd.f32 %v2215, %v368
        %v2224 = vadd.f32 %v2216, %v369
        %v2225 = vadd.f32 %v2217, %v370
        %v2226 = vadd.f32 %v2218, %v371
        %v2227 = vadd.f32 %v2219, %v372
        %v2228 = vadd.f32 %v2220, %v373
        %v2229 = vadd.f32 %v2221, %v374
        %v2230 = vadd.f32 %v2222, %v375
        %2231 = vst [vmem:[%s357] sm:$0xff] %v2223
        %2232 = vst [vmem:[%s357 + $0x8] sm:$0xff] %v2224
        %2233 = vst [vmem:[%s357 + $0x10] sm:$0xff] %v2225
        %2234 = vst [vmem:[%s357 + $0x18] sm:$0xff] %v2226
        %2235 = vst [vmem:[%s357 + $0x20] sm:$0xff] %v2227
        %2236 = vst [vmem:[%s357 + $0x28] sm:$0xff] %v2228
        %2237 = vst [vmem:[%s357 + $0x30] sm:$0xff] %v2229
        %2238 = vst [vmem:[%s357 + $0x38] sm:$0xff] %v2230
        %s2239 = sand.u32 %s210, 1
        %s2240 = scalar_lea.sflag [#allocation4], %s2239
        %s2241 = sand.u32 %s210, 1
        %s2242 = smul.addr %s2241, 64
        %s2243 = scalar_lea.vmem [#allocation8], %s2242
        // Predicated region
        $region65: #{tpu_custom_call.1} parent=51 // pred_check
          %p2244 = pneg %p220
        $region66: #{tpu_custom_call.1} parent=51 // pred_check_branch
          %2246 = sbr.rel (%p2244) target = $region68
        $region67: #{tpu_custom_call.1} parent=51 // pred_region
          %s2248 = ssub.s32 1024, 1024
          %2249 = vsyncadd %s2240, %s2248
          %s2250 = smul.addr %s24, 8
          %s2251 = smul.addr %s2250, 128
          %s2252 = scalar_lea.hbm %s8, %s2251
          %s2253 = sshll.u32 %s2243, 4
          %s2254 = int_to_ptr.vmem [resolvable:$true] %s2253
          %2259 = dma.vmem_to_hbm [thread:$0]  %s2254, 1024, %s2252, %s2240, 256, 256, 16
        $region68: #{tpu_custom_call.1} parent=51 // pred_fallthru
          _
      $region52: #{tpu_custom_call.1} parent=5 // pred_fallthru
        _
      %p2260 = scmp.le.s32.totalorder 2, %s19
      // Predicated region
      $region69: #{tpu_custom_call.1} parent=5 // pred_check
        %p2261 = pneg %p2260
      $region70: #{tpu_custom_call.1} parent=5 // pred_check_branch
        %2263 = sbr.rel (%p2261) target = $region72
      $region71: #{tpu_custom_call.1} parent=5 // pred_region
        %s2264 = ssub.s32 %s19, 2
        // Predicated region
        $region73: #{tpu_custom_call.1} parent=71 // pred_check
          %p2265 = pneg %p226
        $region74: #{tpu_custom_call.1} parent=71 // pred_check_branch
          %2267 = sbr.rel (%p2265) target = $region76
        $region75: #{tpu_custom_call.1} parent=71 // pred_region
          %s2268 = sand.u32 %s211, 1
          %s2269 = scalar_lea.sflag [#allocation4], %s2268
          %s2270 = sand.u32 %s211, 1
          %s2271 = smul.addr %s2270, 64
          %s2272 = scalar_lea.vmem [#allocation8], %s2271
          %2273 = dma.done %s2269, 1024
        $region76: #{tpu_custom_call.1} parent=71 // pred_fallthru
          _
      $region72: #{tpu_custom_call.1} parent=5 // pred_fallthru
        _
    $region6: #{tpu_custom_call.1} parent=1 // loop_footer
      %s23 = sadd.s32 1, %s19
    $region7: #{tpu_custom_call.1} parent=1 // loop_footer_branch
      %18 = sbr.rel target = $region3
    $region8: #{tpu_custom_call.1} parent=1 // loop_exit
      _
    %2274 = vsyncpa [#allocation3], 1
    %s2275 = scalar_lea.sflag [#allocation3], 1
    %2276 = vsyncpa %s2275, 1
    %2277 = vsyncpa [#allocation6], 1
    %2278 = vsyncpa [#allocation4], 1
    %s2279 = scalar_lea.sflag [#allocation4], 1
    %2280 = vsyncpa %s2279, 1

</llo_original>
